<compile_context>
chip_gen: v7x
topology: tpu7x:2x2x1
jax: 0.10.0
libtpu: 0.0.40
codegen_flags: <defaults>
</compile_context>

<pallas_src>
import jax
import jax.numpy as jnp
from jax import lax
from jax.experimental import pallas as pl
from jax.experimental.pallas import tpu as pltpu


def _round_up(n, m):
    return ((n + m - 1) // m) * m


def _vmem_limit(est_bytes):
    # generation-safe scoped-VMEM request (<= 32 MiB works on v5e/v6e/v7x)
    # TODO(synk): raise toward 64-96 MiB on v5e/v6e (128 MiB physical VMEM).
    return int(min(max(4 * est_bytes, 8 << 20), 32 << 20))


_TAPS = ((0, 0), (0, 1), (1, 0), (1, 1))


# --------------------------- Pallas kernels ---------------------------------

def _make_fused_block_kernel(Hd, Wd, Wdg, Wug, cin_p, inner_p, outer_p):
    """LeakyReLU -> conv(4,2,1) -> ReLU -> convT(4,2,1) -> BN partial stats.

    One grid step = one batch element.  Everything between the HBM input tile
    and the pre-BN output tile stays in VMEM (no im2col / intermediates in HBM).
    """
    Hu = Hd + 1
    K1 = 4 * cin_p

    def kernel(xph_ref, wd_ref, wu_ref, y_ref, stats_ref, dpad_ref):
        # ---- LeakyReLU(0.2) on the phase-split input (bf16 storage) --------
        x32 = xph_ref[0].astype(jnp.float32)                 # (Hu, Wxg, 4*cin_p)
        xa = jnp.where(x32 >= 0, x32, 0.2 * x32).astype(xph_ref.dtype)

        # ---- down conv: 2x2 taps over the phase-split input (VMEM im2col) --
        acc = jnp.zeros((Hd * Wdg, inner_p), jnp.float32)
        for t, (a, b) in enumerate(_TAPS):
            lhs = xa[a:a + Hd, b:b + Wdg, :].reshape(Hd * Wdg, K1)
            acc = acc + jnp.dot(lhs, wd_ref[t],
                                preferred_element_type=jnp.float32)

        # ---- ReLU + zero-pad d into VMEM scratch (d never reaches HBM) -----
        d = jnp.maximum(acc, 0.0).reshape(Hd, Wdg, inner_p)
        dpad_ref[...] = jnp.zeros(dpad_ref.shape, dpad_ref.dtype)
        dpad_ref[1:Hd + 1, 1:Wd + 1, :] = d[:, :Wd, :].astype(dpad_ref.dtype)

        # ---- transposed conv (sub-pixel decomposition): 2x2 taps over dpad -
        acc2 = jnp.zeros((Hu * Wug, 4 * outer_p), jnp.float32)
        for t, (a, b) in enumerate(_TAPS):
            lhs = dpad_ref[a:a + Hu, b:b + Wug, :].reshape(Hu * Wug, inner_p)
            acc2 = acc2 + jnp.dot(lhs, wu_ref[t],
                                  preferred_element_type=jnp.float32)
        y4 = acc2.reshape(Hu, Wug, 4 * outer_p)               # cols = (r, s, co)

        # ---- scatter sub-pixel phases into the interleave-ready output and
        #      accumulate BatchNorm partial statistics (fused BN pass 1) ------
        s_acc = jnp.zeros((1, outer_p), jnp.float32)
        ss_acc = jnp.zeros((1, outer_p), jnp.float32)
        for r in (0, 1):
            parts = []
            for s in (0, 1):
                p = 2 * r + s
                blk = y4[r:r + Hd, s:s + Wd, p * outer_p:(p + 1) * outer_p]
                parts.append(blk)
                t0 = jnp.sum(blk, axis=0)                     # (Wd, outer_p)
                s_acc = s_acc + jnp.sum(t0, axis=0, keepdims=True)
                t1 = jnp.sum(blk * blk, axis=0)
                ss_acc = ss_acc + jnp.sum(t1, axis=0, keepdims=True)
            y_ref[0, :, r, :, :] = jnp.concatenate(parts, axis=-1)
        stats_ref[0, 0:1, :] = s_acc
        stats_ref[0, 1:2, :] = ss_acc

    return kernel


def _make_bn_concat_kernel(cin, outer_nc):
    """BatchNorm apply (y*scale + shift) fused with the skip-concat write."""

    def kernel(x_ref, u_ref, scale_ref, shift_ref, o_ref):
        o_ref[0, :, :, 0:cin] = x_ref[0]
        u = u_ref[0, :, :, 0:outer_nc]
        o_ref[0, :, :, cin:cin + outer_nc] = u * scale_ref[...] + shift_ref[...]

    return kernel


# ------------------------------ wrapper --------------------------------------

def unet_skip_innermost(x_nchw, params, *, mxu_dtype=jnp.bfloat16, eps=1e-5):
    """Forward pass of the innermost UnetSkipConnectionBlock (NCHW in/out)."""
    N, Cin, H, W = x_nchw.shape
    assert H % 2 == 0 and W % 2 == 0, "stride-2 conv needs even spatial dims"
    w_down = params["w_down"]                       # (inner_nc, input_nc, 4, 4)
    w_up = params["w_up"]                           # (inner_nc, outer_nc, 4, 4)
    inner_nc, outer_nc = w_down.shape[0], w_up.shape[1]
    Hd, Wd = H // 2, W // 2
    Hu = Hd + 1

    store_dtype = jnp.dtype(mxu_dtype)
    cin_p = _round_up(Cin, 8)                       # sublane-only channel padding
    inner_p = _round_up(inner_nc, 8)
    outer_p = _round_up(outer_nc, 8)
    Wdg = _round_up(Wd, 8)                          # down-GEMM window columns
    Wug = _round_up(Wd + 1, 8)                      # up-GEMM window columns
    Wxg = Wdg + 1                                   # phase-split input width

    # ---- input prep (one pass over x; no patch-matrix materialisation) -----
    x_nhwc = jnp.transpose(x_nchw, (0, 2, 3, 1)).astype(jnp.float32)
    xp = jnp.pad(x_nhwc, ((0, 0), (1, 1), (1, 1), (0, cin_p - Cin)))
    x_ph = xp.reshape(N, Hu, 2, Wd + 1, 2, cin_p)
    x_ph = jnp.transpose(x_ph, (0, 1, 3, 2, 4, 5)).reshape(N, Hu, Wd + 1, 4 * cin_p)
    if Wxg > Wd + 1:
        x_ph = jnp.pad(x_ph, ((0, 0), (0, 0), (0, Wxg - (Wd + 1)), (0, 0)))
    x_ph = x_ph.astype(store_dtype)                 # bf16 activations to the kernel

    # ---- weights: 2x2 "tap" matrices for both convolutions -----------------
    wd = w_down.reshape(inner_nc, Cin, 2, 2, 2, 2)              # (o,c,a,r,b,s)
    wd = jnp.transpose(wd, (2, 4, 3, 5, 1, 0))                  # (a,b,r,s,c,o)
    wd = jnp.pad(wd, ((0, 0), (0, 0), (0, 0), (0, 0),
                      (0, cin_p - Cin), (0, inner_p - inner_nc)))
    wd_mat = wd.reshape(4, 4 * cin_p, inner_p).astype(store_dtype)

    wf = jnp.transpose(w_up[:, :, ::-1, ::-1], (2, 3, 0, 1))    # (kh,kw,ci,co)
    wf = wf.reshape(2, 2, 2, 2, inner_nc, outer_nc)             # (a,r,b,s,ci,co)
    wf = jnp.transpose(wf, (0, 2, 4, 1, 3, 5))                  # (a,b,ci,r,s,co)
    wf = jnp.pad(wf, ((0, 0), (0, 0), (0, inner_p - inner_nc),
                      (0, 0), (0, 0), (0, outer_p - outer_nc)))
    wu_mat = wf.reshape(4, inner_p, 4 * outer_p).astype(store_dtype)

    # ---- kernel A: fused LeakyReLU+conv+ReLU+convT+BN-stats, grid over N ----
    bpe = store_dtype.itemsize
    est_a = (Hu * Wxg * 4 * cin_p * bpe
             + 16 * cin_p * inner_p * bpe + 16 * inner_p * outer_p * bpe
             + Hd * 2 * Wd * 2 * outer_p * 4
             + (Hd + 2) * (Wug + 1) * inner_p * bpe + 2 * outer_p * 4)
    kernel_a = _make_fused_block_kernel(Hd, Wd, Wdg, Wug, cin_p, inner_p, outer_p)
    y, stats = pl.pallas_call(
        kernel_a,
        out_shape=(
            jax.ShapeDtypeStruct((N, Hd, 2, Wd, 2 * outer_p), jnp.float32),
            jax.ShapeDtypeStruct((N, 2, outer_p), jnp.float32)),
        grid=(N,),
        in_specs=[
            pl.BlockSpec((1, Hu, Wxg, 4 * cin_p), lambda n: (n, 0, 0, 0)),
            pl.BlockSpec((4, 4 * cin_p, inner_p), lambda n: (0, 0, 0)),
            pl.BlockSpec((4, inner_p, 4 * outer_p), lambda n: (0, 0, 0)),
        ],
        out_specs=(
            pl.BlockSpec((1, Hd, 2, Wd, 2 * outer_p), lambda n: (n, 0, 0, 0, 0)),
            pl.BlockSpec((1, 2, outer_p), lambda n: (n, 0, 0)),
        ),
        scratch_shapes=[pltpu.VMEM((Hd + 2, Wug + 1, inner_p), store_dtype)],
        compiler_params=pltpu.CompilerParams(
            dimension_semantics=("parallel",),
            vmem_limit_bytes=_vmem_limit(est_a)),
    )(x_ph, wd_mat, wu_mat)
    # TODO(synk): for large spatial extents add a halo'd row-tile grid axis, and
    # single-buffer the constant weight blocks on v7x (32 MiB scoped VMEM).

    # ---- combine per-batch BN partials (tiny) and build scale/shift ---------
    # TODO(synk): switch to a centered / Welford variance if tolerances tighten.
    totals = jnp.sum(stats, axis=0)                               # (2, outer_p)
    cnt = float(N * H * W)
    mean = totals[0, :outer_nc] / cnt
    var = jnp.maximum(totals[1, :outer_nc] / cnt - mean * mean, 0.0)
    inv = lax.rsqrt(var + eps)
    gamma = params["bn_gamma"].astype(jnp.float32)
    beta = params["bn_beta"].astype(jnp.float32)
    scale = (gamma * inv).reshape(1, outer_nc)
    shift = (beta - mean * gamma * inv).reshape(1, outer_nc)

    # free reshape: (N, Hd, 2, Wd, 2*outer_p) is exactly the sub-pixel-interleaved
    # NHWC map laid out as (N, 2*Hd, 2*Wd, outer_p) in row-major order.
    u = y.reshape(N, H, W, outer_p)

    # ---- kernel B: BN apply fused with the skip concatenation ---------------
    est_b = H * W * (Cin + outer_p + Cin + outer_nc) * 4
    out_nhwc = pl.pallas_call(
        _make_bn_concat_kernel(Cin, outer_nc),
        out_shape=jax.ShapeDtypeStruct((N, H, W, Cin + outer_nc), jnp.float32),
        grid=(N,),
        in_specs=[
            pl.BlockSpec((1, H, W, Cin), lambda n: (n, 0, 0, 0)),
            pl.BlockSpec((1, H, W, outer_p), lambda n: (n, 0, 0, 0)),
            pl.BlockSpec((1, outer_nc), lambda n: (0, 0)),
            pl.BlockSpec((1, outer_nc), lambda n: (0, 0)),
        ],
        out_specs=pl.BlockSpec((1, H, W, Cin + outer_nc), lambda n: (n, 0, 0, 0)),
        compiler_params=pltpu.CompilerParams(
            dimension_semantics=("parallel",),
            vmem_limit_bytes=_vmem_limit(est_b)),
    )(x_nhwc, u, scale, shift)

    # single layout change at the very end (torch returns NCHW)
    return jnp.transpose(out_nhwc, (0, 3, 1, 2))


# --------------------------- pure-JAX reference ------------------------------

def _reference(x, params, mxu_dtype=jnp.bfloat16, eps=1e-5):
    w_down, w_up = params["w_down"], params["w_up"]
    xq = x.astype(mxu_dtype).astype(jnp.float32)
    h = jnp.where(xq >= 0, xq, 0.2 * xq)
    h = lax.conv_general_dilated(
        h.astype(mxu_dtype), w_down.astype(mxu_dtype), (2, 2), ((1, 1), (1, 1)),
        dimension_numbers=("NCHW", "OIHW", "NCHW"),
        preferred_element_type=jnp.float32)
    h = jnp.maximum(h, 0.0)
    wflip = jnp.transpose(w_up[:, :, ::-1, ::-1], (1, 0, 2, 3))   # (O, I, kh, kw)
    h = lax.conv_general_dilated(
        h.astype(mxu_dtype), wflip.astype(mxu_dtype), (1, 1), ((2, 2), (2, 2)),
        lhs_dilation=(2, 2), dimension_numbers=("NCHW", "OIHW", "NCHW"),
        preferred_element_type=jnp.float32)
    mean = h.mean(axis=(0, 2, 3), keepdims=True)
    var = ((h - mean) ** 2).mean(axis=(0, 2, 3), keepdims=True)
    h = (h - mean) * lax.rsqrt(var + eps)
    h = h * params["bn_gamma"].reshape(1, -1, 1, 1) + params["bn_beta"].reshape(1, -1, 1, 1)
    return jnp.concatenate([x, h], axis=1)


if __name__ == "__main__":
    key = jax.random.PRNGKey(0)
    k1, k2, k3 = jax.random.split(key, 3)
    N, outer_nc, inner_nc, H, W = 2, 4, 8, 16, 16
    input_nc = outer_nc                      # input_nc=None -> outer_nc in __init__

    x = jax.random.normal(k1, (N, input_nc, H, W), jnp.float32)
    params = {
        "w_down": 0.1 * jax.random.normal(k2, (inner_nc, input_nc, 4, 4), jnp.float32),
        "w_up": 0.1 * jax.random.normal(k3, (inner_nc, outer_nc, 4, 4), jnp.float32),
        "bn_gamma": jnp.ones((outer_nc,), jnp.float32),   # BatchNorm2d default affine
        "bn_beta": jnp.zeros((outer_nc,), jnp.float32),
    }

    # 1) f32 MXU inputs: tight structural check against the pure-JAX reference.
    out32 = jax.block_until_ready(unet_skip_innermost(x, params, mxu_dtype=jnp.float32))
    assert out32.shape == (N, input_nc + outer_nc, H, W), out32.shape
    ref32 = jax.block_until_ready(_reference(x, params, mxu_dtype=jnp.float32))
    err32 = float(jnp.max(jnp.abs(out32 - ref32)))
    assert err32 < 1e-3, err32

    # 2) bf16 activations/weights (production config) vs. a bf16-matmul reference.
    out16 = jax.block_until_ready(unet_skip_innermost(x, params, mxu_dtype=jnp.bfloat16))
    ref16 = jax.block_until_ready(_reference(x, params, mxu_dtype=jnp.bfloat16))
    err16 = float(jnp.max(jnp.abs(out16 - ref16)))
    assert err16 < 3e-2, err16

    print("KERNEL_OK")
</pallas_src>

<mosaic_0001>
module attributes {stable_mosaic.version = 11 : i64} {
  func.func @kernel(%arg0: i32, %arg1: memref<1x9x9x32xf32, #tpu.memory_space<vmem>>, %arg2: memref<4x32x8xf32, #tpu.memory_space<vmem>>, %arg3: memref<4x8x32xf32, #tpu.memory_space<vmem>>, %arg4: memref<1x8x2x8x16xf32, #tpu.memory_space<vmem>>, %arg5: memref<1x2x8xf32, #tpu.memory_space<vmem>>, %arg6: memref<10x17x8xf32, #tpu.memory_space<vmem>>) attributes {dimension_semantics = [#tpu.dimension_semantics<parallel>], iteration_bounds = array<i64: 2>, scalar_prefetch = 0 : i64, scratch_operands = 1 : i64, tpu.core_type = #tpu.core_type<tc>, window_params = [{transform_indices = @transform_0, window_bounds = array<i64: 1, 9, 9, 32>}, {pipeline_mode = #tpu.pipeline_mode<synchronous>, transform_indices = @transform_1, window_bounds = array<i64: 4, 32, 8>}, {pipeline_mode = #tpu.pipeline_mode<synchronous>, transform_indices = @transform_2, window_bounds = array<i64: 4, 8, 32>}, {transform_indices = @transform_3, window_bounds = array<i64: 1, 8, 2, 8, 16>}, {transform_indices = @transform_4, window_bounds = array<i64: 1, 2, 8>}]} {
    %c0 = arith.constant 0 : index
    %c0_0 = arith.constant 0 : index
    %c0_1 = arith.constant 0 : index
    %c0_2 = arith.constant 0 : index
    %0 = vector.load %arg1[%c0, %c0_0, %c0_1, %c0_2] : memref<1x9x9x32xf32, #tpu.memory_space<vmem>>, vector<1x9x9x32xf32>
    %1 = vector.shape_cast %0 : vector<1x9x9x32xf32> to vector<9x9x32xf32>
    %cst = arith.constant 0.000000e+00 : f32
    %2 = vector.broadcast %cst : f32 to vector<9x9x32xf32>
    %3 = arith.cmpf oge, %1, %2 : vector<9x9x32xf32>
    %cst_3 = arith.constant 2.000000e-01 : f32
    %4 = vector.broadcast %cst_3 : f32 to vector<9x9x32xf32>
    %5 = arith.mulf %4, %1 : vector<9x9x32xf32>
    %6 = arith.select %3, %1, %5 : vector<9x9x32xi1>, vector<9x9x32xf32>
    %cst_4 = arith.constant 0.000000e+00 : f32
    %7 = vector.broadcast %cst_4 : f32 to vector<64x8xf32>
    %8 = vector.extract_strided_slice %6 {offsets = [0, 0, 0], sizes = [8, 8, 32], strides = [1, 1, 1]} : vector<9x9x32xf32> to vector<8x8x32xf32>
    %9 = vector.shape_cast %8 : vector<8x8x32xf32> to vector<64x32xf32>
    %c0_5 = arith.constant 0 : index
    %c0_6 = arith.constant 0 : index
    %c0_7 = arith.constant 0 : index
    %10 = vector.load %arg2[%c0_5, %c0_6, %c0_7] : memref<4x32x8xf32, #tpu.memory_space<vmem>>, vector<1x32x8xf32>
    %11 = vector.shape_cast %10 : vector<1x32x8xf32> to vector<32x8xf32>
    %cst_8 = arith.constant dense<0.000000e+00> : vector<64x8xf32>
    %12 = tpu.matmul %9, %11, %cst_8 {dimension_numbers = #tpu.dot_dimension_numbers<[1], [0], [0], [1], [0, 0, 1, 1], [], []>} : vector<64x32xf32>, vector<32x8xf32>, vector<64x8xf32> -> vector<64x8xf32>
    %13 = arith.addf %7, %12 : vector<64x8xf32>
    %14 = vector.extract_strided_slice %6 {offsets = [0, 1, 0], sizes = [8, 8, 32], strides = [1, 1, 1]} : vector<9x9x32xf32> to vector<8x8x32xf32>
    %15 = vector.shape_cast %14 : vector<8x8x32xf32> to vector<64x32xf32>
    %c1 = arith.constant 1 : index
    %c0_9 = arith.constant 0 : index
    %c0_10 = arith.constant 0 : index
    %16 = vector.load %arg2[%c1, %c0_9, %c0_10] : memref<4x32x8xf32, #tpu.memory_space<vmem>>, vector<1x32x8xf32>
    %17 = vector.shape_cast %16 : vector<1x32x8xf32> to vector<32x8xf32>
    %cst_11 = arith.constant dense<0.000000e+00> : vector<64x8xf32>
    %18 = tpu.matmul %15, %17, %cst_11 {dimension_numbers = #tpu.dot_dimension_numbers<[1], [0], [0], [1], [0, 0, 1, 1], [], []>} : vector<64x32xf32>, vector<32x8xf32>, vector<64x8xf32> -> vector<64x8xf32>
    %19 = arith.addf %13, %18 : vector<64x8xf32>
    %20 = vector.extract_strided_slice %6 {offsets = [1, 0, 0], sizes = [8, 8, 32], strides = [1, 1, 1]} : vector<9x9x32xf32> to vector<8x8x32xf32>
    %21 = vector.shape_cast %20 : vector<8x8x32xf32> to vector<64x32xf32>
    %c2 = arith.constant 2 : index
    %c0_12 = arith.constant 0 : index
    %c0_13 = arith.constant 0 : index
    %22 = vector.load %arg2[%c2, %c0_12, %c0_13] : memref<4x32x8xf32, #tpu.memory_space<vmem>>, vector<1x32x8xf32>
    %23 = vector.shape_cast %22 : vector<1x32x8xf32> to vector<32x8xf32>
    %cst_14 = arith.constant dense<0.000000e+00> : vector<64x8xf32>
    %24 = tpu.matmul %21, %23, %cst_14 {dimension_numbers = #tpu.dot_dimension_numbers<[1], [0], [0], [1], [0, 0, 1, 1], [], []>} : vector<64x32xf32>, vector<32x8xf32>, vector<64x8xf32> -> vector<64x8xf32>
    %25 = arith.addf %19, %24 : vector<64x8xf32>
    %26 = vector.extract_strided_slice %6 {offsets = [1, 1, 0], sizes = [8, 8, 32], strides = [1, 1, 1]} : vector<9x9x32xf32> to vector<8x8x32xf32>
    %27 = vector.shape_cast %26 : vector<8x8x32xf32> to vector<64x32xf32>
    %c3 = arith.constant 3 : index
    %c0_15 = arith.constant 0 : index
    %c0_16 = arith.constant 0 : index
    %28 = vector.load %arg2[%c3, %c0_15, %c0_16] : memref<4x32x8xf32, #tpu.memory_space<vmem>>, vector<1x32x8xf32>
    %29 = vector.shape_cast %28 : vector<1x32x8xf32> to vector<32x8xf32>
    %cst_17 = arith.constant dense<0.000000e+00> : vector<64x8xf32>
    %30 = tpu.matmul %27, %29, %cst_17 {dimension_numbers = #tpu.dot_dimension_numbers<[1], [0], [0], [1], [0, 0, 1, 1], [], []>} : vector<64x32xf32>, vector<32x8xf32>, vector<64x8xf32> -> vector<64x8xf32>
    %31 = arith.addf %25, %30 : vector<64x8xf32>
    %cst_18 = arith.constant 0.000000e+00 : f32
    %32 = vector.broadcast %cst_18 : f32 to vector<64x8xf32>
    %33 = arith.maximumf %31, %32 : vector<64x8xf32>
    %34 = vector.shape_cast %33 : vector<64x8xf32> to vector<8x8x8xf32>
    %cst_19 = arith.constant 0.000000e+00 : f32
    %35 = vector.broadcast %cst_19 : f32 to vector<10x17x8xf32>
    %c0_20 = arith.constant 0 : index
    %c0_21 = arith.constant 0 : index
    %c0_22 = arith.constant 0 : index
    %36 = vector.load %arg6[%c0_20, %c0_21, %c0_22] : memref<10x17x8xf32, #tpu.memory_space<vmem>>, vector<10x17x8xf32>
    tpu.vector_store %arg6[%c0_20, %c0_21, %c0_22], %35 {strides = array<i32>} : memref<10x17x8xf32, #tpu.memory_space<vmem>>, vector<10x17x8xf32>,
    %c1_23 = arith.constant 1 : index
    %c1_24 = arith.constant 1 : index
    %c0_25 = arith.constant 0 : index
    %37 = vector.load %arg6[%c1_23, %c1_24, %c0_25] : memref<10x17x8xf32, #tpu.memory_space<vmem>>, vector<8x8x8xf32>
    tpu.vector_store %arg6[%c1_23, %c1_24, %c0_25], %34 {strides = array<i32>} : memref<10x17x8xf32, #tpu.memory_space<vmem>>, vector<8x8x8xf32>,
    %cst_26 = arith.constant 0.000000e+00 : f32
    %38 = vector.broadcast %cst_26 : f32 to vector<144x32xf32>
    %c0_27 = arith.constant 0 : index
    %c0_28 = arith.constant 0 : index
    %c0_29 = arith.constant 0 : index
    %39 = vector.load %arg6[%c0_27, %c0_28, %c0_29] : memref<10x17x8xf32, #tpu.memory_space<vmem>>, vector<9x16x8xf32>
    %40 = vector.shape_cast %39 : vector<9x16x8xf32> to vector<144x8xf32>
    %c0_30 = arith.constant 0 : index
    %c0_31 = arith.constant 0 : index
    %c0_32 = arith.constant 0 : index
    %41 = vector.load %arg3[%c0_30, %c0_31, %c0_32] : memref<4x8x32xf32, #tpu.memory_space<vmem>>, vector<1x8x32xf32>
    %42 = vector.shape_cast %41 : vector<1x8x32xf32> to vector<8x32xf32>
    %cst_33 = arith.constant dense<0.000000e+00> : vector<144x32xf32>
    %43 = tpu.matmul %40, %42, %cst_33 {dimension_numbers = #tpu.dot_dimension_numbers<[1], [0], [0], [1], [0, 0, 1, 1], [], []>} : vector<144x8xf32>, vector<8x32xf32>, vector<144x32xf32> -> vector<144x32xf32>
    %44 = arith.addf %38, %43 : vector<144x32xf32>
    %c0_34 = arith.constant 0 : index
    %c1_35 = arith.constant 1 : index
    %c0_36 = arith.constant 0 : index
    %45 = vector.load %arg6[%c0_34, %c1_35, %c0_36] : memref<10x17x8xf32, #tpu.memory_space<vmem>>, vector<9x16x8xf32>
    %46 = vector.shape_cast %45 : vector<9x16x8xf32> to vector<144x8xf32>
    %c1_37 = arith.constant 1 : index
    %c0_38 = arith.constant 0 : index
    %c0_39 = arith.constant 0 : index
    %47 = vector.load %arg3[%c1_37, %c0_38, %c0_39] : memref<4x8x32xf32, #tpu.memory_space<vmem>>, vector<1x8x32xf32>
    %48 = vector.shape_cast %47 : vector<1x8x32xf32> to vector<8x32xf32>
    %cst_40 = arith.constant dense<0.000000e+00> : vector<144x32xf32>
    %49 = tpu.matmul %46, %48, %cst_40 {dimension_numbers = #tpu.dot_dimension_numbers<[1], [0], [0], [1], [0, 0, 1, 1], [], []>} : vector<144x8xf32>, vector<8x32xf32>, vector<144x32xf32> -> vector<144x32xf32>
    %50 = arith.addf %44, %49 : vector<144x32xf32>
    %c1_41 = arith.constant 1 : index
    %c0_42 = arith.constant 0 : index
    %c0_43 = arith.constant 0 : index
    %51 = vector.load %arg6[%c1_41, %c0_42, %c0_43] : memref<10x17x8xf32, #tpu.memory_space<vmem>>, vector<9x16x8xf32>
    %52 = vector.shape_cast %51 : vector<9x16x8xf32> to vector<144x8xf32>
    %c2_44 = arith.constant 2 : index
    %c0_45 = arith.constant 0 : index
    %c0_46 = arith.constant 0 : index
    %53 = vector.load %arg3[%c2_44, %c0_45, %c0_46] : memref<4x8x32xf32, #tpu.memory_space<vmem>>, vector<1x8x32xf32>
    %54 = vector.shape_cast %53 : vector<1x8x32xf32> to vector<8x32xf32>
    %cst_47 = arith.constant dense<0.000000e+00> : vector<144x32xf32>
    %55 = tpu.matmul %52, %54, %cst_47 {dimension_numbers = #tpu.dot_dimension_numbers<[1], [0], [0], [1], [0, 0, 1, 1], [], []>} : vector<144x8xf32>, vector<8x32xf32>, vector<144x32xf32> -> vector<144x32xf32>
    %56 = arith.addf %50, %55 : vector<144x32xf32>
    %c1_48 = arith.constant 1 : index
    %c1_49 = arith.constant 1 : index
    %c0_50 = arith.constant 0 : index
    %57 = vector.load %arg6[%c1_48, %c1_49, %c0_50] : memref<10x17x8xf32, #tpu.memory_space<vmem>>, vector<9x16x8xf32>
    %58 = vector.shape_cast %57 : vector<9x16x8xf32> to vector<144x8xf32>
    %c3_51 = arith.constant 3 : index
    %c0_52 = arith.constant 0 : index
    %c0_53 = arith.constant 0 : index
    %59 = vector.load %arg3[%c3_51, %c0_52, %c0_53] : memref<4x8x32xf32, #tpu.memory_space<vmem>>, vector<1x8x32xf32>
    %60 = vector.shape_cast %59 : vector<1x8x32xf32> to vector<8x32xf32>
    %cst_54 = arith.constant dense<0.000000e+00> : vector<144x32xf32>
    %61 = tpu.matmul %58, %60, %cst_54 {dimension_numbers = #tpu.dot_dimension_numbers<[1], [0], [0], [1], [0, 0, 1, 1], [], []>} : vector<144x8xf32>, vector<8x32xf32>, vector<144x32xf32> -> vector<144x32xf32>
    %62 = arith.addf %56, %61 : vector<144x32xf32>
    %63 = vector.shape_cast %62 : vector<144x32xf32> to vector<9x16x32xf32>
    %cst_55 = arith.constant 0.000000e+00 : f32
    %64 = vector.broadcast %cst_55 : f32 to vector<1x8xf32>
    %cst_56 = arith.constant 0.000000e+00 : f32
    %65 = vector.broadcast %cst_56 : f32 to vector<1x8xf32>
    %66 = vector.extract_strided_slice %63 {offsets = [0, 0, 0], sizes = [8, 8, 8], strides = [1, 1, 1]} : vector<9x16x32xf32> to vector<8x8x8xf32>
    %cst_57 = arith.constant dense<0.000000e+00> : vector<8x8xf32>
    %67 = vector.multi_reduction <add>, %66, %cst_57 [0] : vector<8x8x8xf32> to vector<8x8xf32>
    %cst_58 = arith.constant dense<0.000000e+00> : vector<8xf32>
    %68 = vector.multi_reduction <add>, %67, %cst_58 [0] : vector<8x8xf32> to vector<8xf32>
    %69 = vector.shape_cast %68 : vector<8xf32> to vector<1x8xf32>
    %70 = arith.addf %64, %69 : vector<1x8xf32>
    %71 = arith.mulf %66, %66 : vector<8x8x8xf32>
    %cst_59 = arith.constant dense<0.000000e+00> : vector<8x8xf32>
    %72 = vector.multi_reduction <add>, %71, %cst_59 [0] : vector<8x8x8xf32> to vector<8x8xf32>
    %cst_60 = arith.constant dense<0.000000e+00> : vector<8xf32>
    %73 = vector.multi_reduction <add>, %72, %cst_60 [0] : vector<8x8xf32> to vector<8xf32>
    %74 = vector.shape_cast %73 : vector<8xf32> to vector<1x8xf32>
    %75 = arith.addf %65, %74 : vector<1x8xf32>
    %76 = vector.extract_strided_slice %63 {offsets = [0, 1, 8], sizes = [8, 8, 8], strides = [1, 1, 1]} : vector<9x16x32xf32> to vector<8x8x8xf32>
    %cst_61 = arith.constant dense<0.000000e+00> : vector<8x8xf32>
    %77 = vector.multi_reduction <add>, %76, %cst_61 [0] : vector<8x8x8xf32> to vector<8x8xf32>
    %cst_62 = arith.constant dense<0.000000e+00> : vector<8xf32>
    %78 = vector.multi_reduction <add>, %77, %cst_62 [0] : vector<8x8xf32> to vector<8xf32>
    %79 = vector.shape_cast %78 : vector<8xf32> to vector<1x8xf32>
    %80 = arith.addf %70, %79 : vector<1x8xf32>
    %81 = arith.mulf %76, %76 : vector<8x8x8xf32>
    %cst_63 = arith.constant dense<0.000000e+00> : vector<8x8xf32>
    %82 = vector.multi_reduction <add>, %81, %cst_63 [0] : vector<8x8x8xf32> to vector<8x8xf32>
    %cst_64 = arith.constant dense<0.000000e+00> : vector<8xf32>
    %83 = vector.multi_reduction <add>, %82, %cst_64 [0] : vector<8x8xf32> to vector<8xf32>
    %84 = vector.shape_cast %83 : vector<8xf32> to vector<1x8xf32>
    %85 = arith.addf %75, %84 : vector<1x8xf32>
    %86 = tpu.concatenate %66, %76 in 2 : vector<8x8x8xf32>, vector<8x8x8xf32> -> vector<8x8x16xf32>
    %c0_65 = arith.constant 0 : index
    %c0_66 = arith.constant 0 : index
    %c0_67 = arith.constant 0 : index
    %c0_68 = arith.constant 0 : index
    %c0_69 = arith.constant 0 : index
    %87 = vector.load %arg4[%c0_65, %c0_66, %c0_67, %c0_68, %c0_69] : memref<1x8x2x8x16xf32, #tpu.memory_space<vmem>>, vector<1x8x1x8x16xf32>
    %88 = vector.shape_cast %87 : vector<1x8x1x8x16xf32> to vector<8x8x16xf32>
    %89 = vector.shape_cast %86 : vector<8x8x16xf32> to vector<1x8x1x8x16xf32>
    tpu.vector_store %arg4[%c0_65, %c0_66, %c0_67, %c0_68, %c0_69], %89 {strides = array<i32>} : memref<1x8x2x8x16xf32, #tpu.memory_space<vmem>>, vector<1x8x1x8x16xf32>,
    %90 = vector.extract_strided_slice %63 {offsets = [1, 0, 16], sizes = [8, 8, 8], strides = [1, 1, 1]} : vector<9x16x32xf32> to vector<8x8x8xf32>
    %cst_70 = arith.constant dense<0.000000e+00> : vector<8x8xf32>
    %91 = vector.multi_reduction <add>, %90, %cst_70 [0] : vector<8x8x8xf32> to vector<8x8xf32>
    %cst_71 = arith.constant dense<0.000000e+00> : vector<8xf32>
    %92 = vector.multi_reduction <add>, %91, %cst_71 [0] : vector<8x8xf32> to vector<8xf32>
    %93 = vector.shape_cast %92 : vector<8xf32> to vector<1x8xf32>
    %94 = arith.addf %80, %93 : vector<1x8xf32>
    %95 = arith.mulf %90, %90 : vector<8x8x8xf32>
    %cst_72 = arith.constant dense<0.000000e+00> : vector<8x8xf32>
    %96 = vector.multi_reduction <add>, %95, %cst_72 [0] : vector<8x8x8xf32> to vector<8x8xf32>
    %cst_73 = arith.constant dense<0.000000e+00> : vector<8xf32>
    %97 = vector.multi_reduction <add>, %96, %cst_73 [0] : vector<8x8xf32> to vector<8xf32>
    %98 = vector.shape_cast %97 : vector<8xf32> to vector<1x8xf32>
    %99 = arith.addf %85, %98 : vector<1x8xf32>
    %100 = vector.extract_strided_slice %63 {offsets = [1, 1, 24], sizes = [8, 8, 8], strides = [1, 1, 1]} : vector<9x16x32xf32> to vector<8x8x8xf32>
    %cst_74 = arith.constant dense<0.000000e+00> : vector<8x8xf32>
    %101 = vector.multi_reduction <add>, %100, %cst_74 [0] : vector<8x8x8xf32> to vector<8x8xf32>
    %cst_75 = arith.constant dense<0.000000e+00> : vector<8xf32>
    %102 = vector.multi_reduction <add>, %101, %cst_75 [0] : vector<8x8xf32> to vector<8xf32>
    %103 = vector.shape_cast %102 : vector<8xf32> to vector<1x8xf32>
    %104 = arith.addf %94, %103 : vector<1x8xf32>
    %105 = arith.mulf %100, %100 : vector<8x8x8xf32>
    %cst_76 = arith.constant dense<0.000000e+00> : vector<8x8xf32>
    %106 = vector.multi_reduction <add>, %105, %cst_76 [0] : vector<8x8x8xf32> to vector<8x8xf32>
    %cst_77 = arith.constant dense<0.000000e+00> : vector<8xf32>
    %107 = vector.multi_reduction <add>, %106, %cst_77 [0] : vector<8x8xf32> to vector<8xf32>
    %108 = vector.shape_cast %107 : vector<8xf32> to vector<1x8xf32>
    %109 = arith.addf %99, %108 : vector<1x8xf32>
    %110 = tpu.concatenate %90, %100 in 2 : vector<8x8x8xf32>, vector<8x8x8xf32> -> vector<8x8x16xf32>
    %c0_78 = arith.constant 0 : index
    %c0_79 = arith.constant 0 : index
    %c1_80 = arith.constant 1 : index
    %c0_81 = arith.constant 0 : index
    %c0_82 = arith.constant 0 : index
    %111 = vector.load %arg4[%c0_78, %c0_79, %c1_80, %c0_81, %c0_82] : memref<1x8x2x8x16xf32, #tpu.memory_space<vmem>>, vector<1x8x1x8x16xf32>
    %112 = vector.shape_cast %111 : vector<1x8x1x8x16xf32> to vector<8x8x16xf32>
    %113 = vector.shape_cast %110 : vector<8x8x16xf32> to vector<1x8x1x8x16xf32>
    tpu.vector_store %arg4[%c0_78, %c0_79, %c1_80, %c0_81, %c0_82], %113 {strides = array<i32>} : memref<1x8x2x8x16xf32, #tpu.memory_space<vmem>>, vector<1x8x1x8x16xf32>,
    %c0_83 = arith.constant 0 : index
    %c0_84 = arith.constant 0 : index
    %c0_85 = arith.constant 0 : index
    %114 = vector.load %arg5[%c0_83, %c0_84, %c0_85] : memref<1x2x8xf32, #tpu.memory_space<vmem>>, vector<1x1x8xf32>
    %115 = vector.shape_cast %114 : vector<1x1x8xf32> to vector<1x8xf32>
    %116 = vector.shape_cast %104 : vector<1x8xf32> to vector<1x1x8xf32>
    tpu.vector_store %arg5[%c0_83, %c0_84, %c0_85], %116 {strides = array<i32>} : memref<1x2x8xf32, #tpu.memory_space<vmem>>, vector<1x1x8xf32>,
    %c0_86 = arith.constant 0 : index
    %c1_87 = arith.constant 1 : index
    %c0_88 = arith.constant 0 : index
    %117 = vector.load %arg5[%c0_86, %c1_87, %c0_88] : memref<1x2x8xf32, #tpu.memory_space<vmem>>, vector<1x1x8xf32>
    %118 = vector.shape_cast %117 : vector<1x1x8xf32> to vector<1x8xf32>
    %119 = vector.shape_cast %109 : vector<1x8xf32> to vector<1x1x8xf32>
    tpu.vector_store %arg5[%c0_86, %c1_87, %c0_88], %119 {strides = array<i32>} : memref<1x2x8xf32, #tpu.memory_space<vmem>>, vector<1x1x8xf32>,
    return
  }
  func.func @transform_0(%arg0: i32) -> (i32, i32, i32, i32) {
    %c0_i32 = arith.constant 0 : i32
    %c0_i32_0 = arith.constant 0 : i32
    %c0_i32_1 = arith.constant 0 : i32
    %c0_i32_2 = arith.constant 0 : i32
    return %arg0, %c0_i32, %c0_i32_0, %c0_i32_1 : i32, i32, i32, i32
  }
  func.func @transform_1(%arg0: i32) -> (i32, i32, i32) {
    %c0_i32 = arith.constant 0 : i32
    %c0_i32_0 = arith.constant 0 : i32
    %c0_i32_1 = arith.constant 0 : i32
    %c0_i32_2 = arith.constant 0 : i32
    return %c0_i32, %c0_i32_0, %c0_i32_1 : i32, i32, i32
  }
  func.func @transform_2(%arg0: i32) -> (i32, i32, i32) {
    %c0_i32 = arith.constant 0 : i32
    %c0_i32_0 = arith.constant 0 : i32
    %c0_i32_1 = arith.constant 0 : i32
    %c0_i32_2 = arith.constant 0 : i32
    return %c0_i32, %c0_i32_0, %c0_i32_1 : i32, i32, i32
  }
  func.func @transform_3(%arg0: i32) -> (i32, i32, i32, i32, i32) {
    %c0_i32 = arith.constant 0 : i32
    %c0_i32_0 = arith.constant 0 : i32
    %c0_i32_1 = arith.constant 0 : i32
    %c0_i32_2 = arith.constant 0 : i32
    %c0_i32_3 = arith.constant 0 : i32
    return %arg0, %c0_i32, %c0_i32_0, %c0_i32_1, %c0_i32_2 : i32, i32, i32, i32, i32
  }
  func.func @transform_4(%arg0: i32) -> (i32, i32, i32) {
    %c0_i32 = arith.constant 0 : i32
    %c0_i32_0 = arith.constant 0 : i32
    %c0_i32_1 = arith.constant 0 : i32
    return %arg0, %c0_i32, %c0_i32_0 : i32, i32, i32
  }
}

</mosaic_0001>

<llo_original>
// kernel: tpu_custom_call.1
$region0: #{tpu_custom_call.1}
  #allocation0 [shape = 'u32[]', space=smem, size = 0x4, offset = 0x4, fixed_abs, tag = 'smem constant byte address 0x4 - core index']
  #allocation1 [shape = 'u32[144,128]{1,0:T(1,128)}', space=vmem, size = 0x12000, scoped, tag = 'internal scratch']
  #allocation2 [shape = 'f32[10,17,8]{2,1,0:T(8,128)}', space=vmem, size = 0x1e000, scoped, tag = 'scratch operand']
  %s0 = inlined_call_operand.vmem [shape: f32[2,9,9,32], index: 0, kind: input, shape index: {}]
  %s1 = inlined_call_operand.vmem [shape: f32[4,32,8], index: 1, kind: input, shape index: {}]
  %s2 = inlined_call_operand.vmem [shape: f32[4,8,32], index: 2, kind: input, shape index: {}]
  %s3 = inlined_call_operand.hbm [shape: f32[2,8,2,8,16], index: 3, kind: output, shape index: {0}]
  %s4 = inlined_call_operand.hbm [shape: f32[2,2,8], index: 4, kind: output, shape index: {1}]
  %5 = xla_tuple %s3, %s4
  %s6 = sld [smem:[#allocation0]]
  $region53: #{tpu_custom_call.1} parent=0
    _
  %s8 = ssub.s32 1, %s6
  %s9 = scalar_select 0, %s8, %s6
  $region1: #{tpu_custom_call.1} parent=0
    #allocation3 [shape = 'u8[131072]{0}', space=vmem, size = 0x20000, scoped, tag = 'output window, operand 0']
    #allocation4 [shape = 's32[2]{0}', space=sflag, size = 0x8, scoped, tag = 'scoped memory for tpu_custom_call.1']
    #allocation5 [shape = 'u8[2048]{0}', space=vmem, size = 0x800, scoped, tag = 'output window, operand 1']
    #allocation6 [shape = 's32[2]{0}', space=sflag, size = 0x8, scoped, tag = 'scoped memory for tpu_custom_call.1']
    %10 = vsyncpa [#allocation4], 0
    %s11 = scalar_lea.sflag [#allocation4], 1
    %12 = vsyncpa %s11, 0
    %13 = vsyncpa [#allocation6], 0
    %s14 = scalar_lea.sflag [#allocation6], 1
    %15 = vsyncpa %s14, 0
    loop: start=0, step=1, limit=4
    $region2: #{tpu_custom_call.1} parent=1 // loop_pre_header
      _
    $region3: #{tpu_custom_call.1} parent=1 // loop_header
      %s17 = sphi 0, %s21
      %p18 = scmp.ge.s32.totalorder %s17, 4
      %s27 = sphi 0, %s29
      %s30 = sphi 0, %s27
      %s31 = sphi 0, %s30
      %s47 = sphi 0, %s31
      %s51 = sphi 0, %s51
      %s53 = sphi 0, %s51
      %s54 = sphi 0, %s53
      %s68 = sphi 0, %s54
      %s72 = sphi 0, %s72
      %s74 = sphi 0, %s72
      %s75 = sphi 0, %s74
      %s89 = sphi 0, %s75
      %s95 = sphi 0, %s97
      %s98 = sphi 0, %s95
      %s99 = sphi 0, %s98
      %s115 = sphi 0, %s99
      %s121 = sphi 0, %s123
      %s124 = sphi 0, %s121
      %s125 = sphi 0, %s124
      %s141 = sphi 0, %s125
    $region4: #{tpu_custom_call.1} parent=1 // loop_header_branch
      %20 = sbr.rel (%p18) target = $region8
    $region5: #{tpu_custom_call.1} parent=1 // loop_body
      %s22 = ssub.s32 %s17, 1
      %s23 = ssub.s32 %s17, 2
      %s24 = sadd.s32 %s17, 1
      %s25 = ssub.s32 %s17, %s24
      %p26 = scmp.eq.s32.totalorder %s25, 0
      %s28 = sadd.s32 %s27, 1
      %s29 = scalar_select %p26, %s27, %s28
      %p32 = pneg %p26
      %p33 = scmp.eq.s32.totalorder %s17, 1
      %p34 = por %p32, %p33
      %p35 = scmp.ne.s32.totalorder %s27, %s30
      %p36 = scmp.eq.s32.totalorder %s17, 0
      %p37 = por %p35, %p36
      %p38 = scmp.ne.s32.totalorder %s27, %s30
      %p39 = scmp.eq.s32.totalorder %s22, 1
      %p40 = por %p38, %p39
      %p41 = scmp.ne.s32.totalorder %s30, %s31
      %p42 = scmp.eq.s32.totalorder %s22, 0
      %p43 = por %p41, %p42
      %p44 = scmp.ne.s32.totalorder %s30, %s31
      %p45 = scmp.eq.s32.totalorder %s23, 1
      %p46 = por %p44, %p45
      %p48 = scmp.ne.s32.totalorder %s31, %s47
      %p49 = scmp.eq.s32.totalorder %s23, 0
      %p50 = por %p48, %p49
      %s52 = sadd.s32 %s51, 1
      %p55 = scmp.eq.s32.totalorder %s17, 1
      %p56 = scmp.ne.s32.totalorder %s51, %s53
      %p57 = scmp.eq.s32.totalorder %s17, 0
      %p58 = por %p56, %p57
      %p59 = scmp.ne.s32.totalorder %s51, %s53
      %p60 = scmp.eq.s32.totalorder %s22, 1
      %p61 = por %p59, %p60
      %p62 = scmp.ne.s32.totalorder %s53, %s54
      %p63 = scmp.eq.s32.totalorder %s22, 0
      %p64 = por %p62, %p63
      %p65 = scmp.ne.s32.totalorder %s53, %s54
      %p66 = scmp.eq.s32.totalorder %s23, 1
      %p67 = por %p65, %p66
      %p69 = scmp.ne.s32.totalorder %s54, %s68
      %p70 = scmp.eq.s32.totalorder %s23, 0
      %p71 = por %p69, %p70
      %s73 = sadd.s32 %s72, 1
      %p76 = scmp.eq.s32.totalorder %s17, 1
      %p77 = scmp.ne.s32.totalorder %s72, %s74
      %p78 = scmp.eq.s32.totalorder %s17, 0
      %p79 = por %p77, %p78
      %p80 = scmp.ne.s32.totalorder %s72, %s74
      %p81 = scmp.eq.s32.totalorder %s22, 1
      %p82 = por %p80, %p81
      %p83 = scmp.ne.s32.totalorder %s74, %s75
      %p84 = scmp.eq.s32.totalorder %s22, 0
      %p85 = por %p83, %p84
      %p86 = scmp.ne.s32.totalorder %s74, %s75
      %p87 = scmp.eq.s32.totalorder %s23, 1
      %p88 = por %p86, %p87
      %p90 = scmp.ne.s32.totalorder %s75, %s89
      %p91 = scmp.eq.s32.totalorder %s23, 0
      %p92 = por %p90, %p91
      %s93 = ssub.s32 %s17, %s24
      %p94 = scmp.eq.s32.totalorder %s93, 0
      %s96 = sadd.s32 %s95, 1
      %s97 = scalar_select %p94, %s95, %s96
      %p100 = pneg %p94
      %p101 = scmp.eq.s32.totalorder %s17, 1
      %p102 = por %p100, %p101
      %p103 = scmp.ne.s32.totalorder %s95, %s98
      %p104 = scmp.eq.s32.totalorder %s17, 0
      %p105 = por %p103, %p104
      %p106 = scmp.ne.s32.totalorder %s95, %s98
      %p107 = scmp.eq.s32.totalorder %s22, 1
      %p108 = por %p106, %p107
      %p109 = scmp.ne.s32.totalorder %s98, %s99
      %p110 = scmp.eq.s32.totalorder %s22, 0
      %p111 = por %p109, %p110
      %p112 = scmp.ne.s32.totalorder %s98, %s99
      %p113 = scmp.eq.s32.totalorder %s23, 1
      %p114 = por %p112, %p113
      %p116 = scmp.ne.s32.totalorder %s99, %s115
      %p117 = scmp.eq.s32.totalorder %s23, 0
      %p118 = por %p116, %p117
      %s119 = ssub.s32 %s17, %s24
      %p120 = scmp.eq.s32.totalorder %s119, 0
      %s122 = sadd.s32 %s121, 1
      %s123 = scalar_select %p120, %s121, %s122
      %p126 = pneg %p120
      %p127 = scmp.eq.s32.totalorder %s17, 1
      %p128 = por %p126, %p127
      %p129 = scmp.ne.s32.totalorder %s121, %s124
      %p130 = scmp.eq.s32.totalorder %s17, 0
      %p131 = por %p129, %p130
      %p132 = scmp.ne.s32.totalorder %s121, %s124
      %p133 = scmp.eq.s32.totalorder %s22, 1
      %p134 = por %p132, %p133
      %p135 = scmp.ne.s32.totalorder %s124, %s125
      %p136 = scmp.eq.s32.totalorder %s22, 0
      %p137 = por %p135, %p136
      %p138 = scmp.ne.s32.totalorder %s124, %s125
      %p139 = scmp.eq.s32.totalorder %s23, 1
      %p140 = por %p138, %p139
      %p142 = scmp.ne.s32.totalorder %s125, %s141
      %p143 = scmp.eq.s32.totalorder %s23, 0
      %p144 = por %p142, %p143
      %p145 = scmp.le.s32.totalorder 1, %s17
      %p146 = scmp.lt.s32.totalorder %s17, 3
      %p147 = pnand %p145, %p146
      %p148 = pneg %p147
      // Predicated region
      $region9: #{tpu_custom_call.1} parent=5 // pred_check
        _
      $region10: #{tpu_custom_call.1} parent=5 // pred_check_branch
        %150 = sbr.rel (%p147) target = $region12
      $region11: #{tpu_custom_call.1} parent=5 // pred_region
        %s151 = ssub.s32 %s17, 1
        // Predicated region
        $region13: #{tpu_custom_call.1} parent=11 // pred_check
          %p152 = pneg %p64
        $region14: #{tpu_custom_call.1} parent=11 // pred_check_branch
          %154 = sbr.rel (%p152) target = $region16
        $region15: #{tpu_custom_call.1} parent=11 // pred_region
          _
        $region16: #{tpu_custom_call.1} parent=11 // pred_fallthru
          _
        // Predicated region
        $region17: #{tpu_custom_call.1} parent=11 // pred_check
          %p155 = pneg %p85
        $region18: #{tpu_custom_call.1} parent=11 // pred_check_branch
          %157 = sbr.rel (%p155) target = $region20
        $region19: #{tpu_custom_call.1} parent=11 // pred_region
          _
        $region20: #{tpu_custom_call.1} parent=11 // pred_fallthru
          _
      $region12: #{tpu_custom_call.1} parent=5 // pred_fallthru
        _
      %p158 = scmp.lt.s32.totalorder %s17, 2
      // Predicated region
      $region21: #{tpu_custom_call.1} parent=5 // pred_check
        %p159 = pneg %p158
      $region22: #{tpu_custom_call.1} parent=5 // pred_check_branch
        %161 = sbr.rel (%p159) target = $region24
      $region23: #{tpu_custom_call.1} parent=5 // pred_region
        // Predicated region
        $region25: #{tpu_custom_call.1} parent=23 // pred_check
          %p162 = pneg %p37
        $region26: #{tpu_custom_call.1} parent=23 // pred_check_branch
          %164 = sbr.rel (%p162) target = $region28
        $region27: #{tpu_custom_call.1} parent=23 // pred_region
          %p165 = scmp.lt.s32.totalorder %s17, 1
          %s166 = scalar_select %p165, %s17, 1
          %s167 = smul.addr %s166, 18
          %s168 = smul.addr %s167, 8
          %s169 = scalar_lea.vmem %s0, %s168
        $region28: #{tpu_custom_call.1} parent=23 // pred_fallthru
          _
      $region24: #{tpu_custom_call.1} parent=5 // pred_fallthru
        _
      %p170 = scmp.le.s32.totalorder 1, %s17
      %p171 = scmp.lt.s32.totalorder %s17, 3
      %p172 = pnand %p170, %p171
      %p173 = pneg %p172
      // Predicated region
      $region29: #{tpu_custom_call.1} parent=5 // pred_check
        _
      $region30: #{tpu_custom_call.1} parent=5 // pred_check_branch
        %175 = sbr.rel (%p172) target = $region32
      $region31: #{tpu_custom_call.1} parent=5 // pred_region
        %s176 = ssub.s32 %s17, 1
        %p177 = scmp.lt.s32.totalorder %s22, 1
        %s178 = scalar_select %p177, %s22, 1
        %s179 = smul.addr %s178, 18
        %s180 = smul.addr %s179, 8
        %s181 = scalar_lea.vmem %s0, %s180
        %p182 = pneg %p43
        %p183 = pneg %p40
        %p184 = pneg %p64
        %p185 = pneg %p61
        %p186 = pneg %p85
        %p187 = pneg %p82
        %p188 = pneg %p111
        %p189 = pneg %p108
        %s190 = sand.u32 %s98, 1
        %s191 = scalar_lea.sflag [#allocation4], %s190
        %s192 = sand.u32 %s98, 1
        %s193 = smul.addr %s192, 128
        %s194 = scalar_lea.vmem [#allocation3], %s193
        %p195 = pneg %p137
        %p196 = pneg %p134
        %s197 = sand.u32 %s124, 1
        %s198 = scalar_lea.sflag [#allocation6], %s197
        %s199 = sand.u32 %s124, 1
        %s200 = smul.addr %s199, 2
        %s201 = scalar_lea.vmem [#allocation5], %s200
        %p202 = scmp.lt.s32.totalorder %s22, 1
        %s203 = scalar_select %p202, %s22, 1
        %s204 = smul.addr %s203, 18
        %s205 = smul.addr %s204, 8
        %s206 = scalar_lea.vmem %s0, %s205
        %v207 = vld [vmem:[%s206] sm:$0xff]
        %v208 = vld [vmem:[%s206 + $0x8] sm:$0x1]
        %v209 = vld [vmem:[%s206 + $0x10] sm:$0xff]
        %v210 = vld [vmem:[%s206 + $0x18] sm:$0x1]
        %v211 = vld [vmem:[%s206 + $0x20] sm:$0xff]
        %v212 = vld [vmem:[%s206 + $0x28] sm:$0x1]
        %v213 = vld [vmem:[%s206 + $0x30] sm:$0xff]
        %v214 = vld [vmem:[%s206 + $0x38] sm:$0x1]
        %v215 = vld [vmem:[%s206 + $0x40] sm:$0xff]
        %v216 = vld [vmem:[%s206 + $0x48] sm:$0x1]
        %v217 = vld [vmem:[%s206 + $0x50] sm:$0xff]
        %v218 = vld [vmem:[%s206 + $0x58] sm:$0x1]
        %v219 = vld [vmem:[%s206 + $0x60] sm:$0xff]
        %v220 = vld [vmem:[%s206 + $0x68] sm:$0x1]
        %v221 = vld [vmem:[%s206 + $0x70] sm:$0xff]
        %v222 = vld [vmem:[%s206 + $0x78] sm:$0x1]
        %v223 = vld [vmem:[%s206 + $0x80] sm:$0xff]
        %v224 = vld [vmem:[%s206 + $0x88] sm:$0x1]
        %vm225 = vcmp.ge.f32.partialorder %v207, 0.0
        %vm226 = vcmp.ge.f32.partialorder %v208, 0.0
        %vm227 = vcmp.ge.f32.partialorder %v209, 0.0
        %vm228 = vcmp.ge.f32.partialorder %v210, 0.0
        %vm229 = vcmp.ge.f32.partialorder %v211, 0.0
        %vm230 = vcmp.ge.f32.partialorder %v212, 0.0
        %vm231 = vcmp.ge.f32.partialorder %v213, 0.0
        %vm232 = vcmp.ge.f32.partialorder %v214, 0.0
        %vm233 = vcmp.ge.f32.partialorder %v215, 0.0
        %vm234 = vcmp.ge.f32.partialorder %v216, 0.0
        %vm235 = vcmp.ge.f32.partialorder %v217, 0.0
        %vm236 = vcmp.ge.f32.partialorder %v218, 0.0
        %vm237 = vcmp.ge.f32.partialorder %v219, 0.0
        %vm238 = vcmp.ge.f32.partialorder %v220, 0.0
        %vm239 = vcmp.ge.f32.partialorder %v221, 0.0
        %vm240 = vcmp.ge.f32.partialorder %v222, 0.0
        %vm241 = vcmp.ge.f32.partialorder %v223, 0.0
        %vm242 = vcmp.ge.f32.partialorder %v224, 0.0
        %v243 = vmul.f32 %v207, 0.2
        %v244 = vmul.f32 %v208, 0.2
        %v245 = vmul.f32 %v209, 0.2
        %v246 = vmul.f32 %v210, 0.2
        %v247 = vmul.f32 %v211, 0.2
        %v248 = vmul.f32 %v212, 0.2
        %v249 = vmul.f32 %v213, 0.2
        %v250 = vmul.f32 %v214, 0.2
        %v251 = vmul.f32 %v215, 0.2
        %v252 = vmul.f32 %v216, 0.2
        %v253 = vmul.f32 %v217, 0.2
        %v254 = vmul.f32 %v218, 0.2
        %v255 = vmul.f32 %v219, 0.2
        %v256 = vmul.f32 %v220, 0.2
        %v257 = vmul.f32 %v221, 0.2
        %v258 = vmul.f32 %v222, 0.2
        %v259 = vmul.f32 %v223, 0.2
        %v260 = vmul.f32 %v224, 0.2
        %v261 = vsel %vm225, %v207, %v243
        %v262 = vsel %vm226, %v208, %v244
        %v263 = vsel %vm227, %v209, %v245
        %v264 = vsel %vm228, %v210, %v246
        %v265 = vsel %vm229, %v211, %v247
        %v266 = vsel %vm230, %v212, %v248
        %v267 = vsel %vm231, %v213, %v249
        %v268 = vsel %vm232, %v214, %v250
        %v269 = vsel %vm233, %v215, %v251
        %v270 = vsel %vm234, %v216, %v252
        %v271 = vsel %vm235, %v217, %v253
        %v272 = vsel %vm236, %v218, %v254
        %v273 = vsel %vm237, %v219, %v255
        %v274 = vsel %vm238, %v220, %v256
        %v275 = vsel %vm239, %v221, %v257
        %v276 = vsel %vm240, %v222, %v258
        %v277 = vsel %vm241, %v223, %v259
        %v278 = vsel %vm242, %v224, %v260
        %v279 = vld [vmem:[%s1] sm:$0xff]
        %v280 = vld [vmem:[%s1 + $0x8] sm:$0xff]
        %v281 = vld [vmem:[%s1 + $0x10] sm:$0xff]
        %v282 = vld [vmem:[%s1 + $0x18] sm:$0xff]
        %vm299 = vcmask 1046528
        %v300 = vrot.slane %v261, 1
        %v301 = vrot.slane %v262, 1
        %v302 = vsel %vm299, %v300, %v301
        %v303 = vrot.slane %v263, 1
        %v304 = vrot.slane %v264, 1
        %v305 = vsel %vm299, %v303, %v304
        %v306 = vrot.slane %v265, 1
        %v307 = vrot.slane %v266, 1
        %v308 = vsel %vm299, %v306, %v307
        %v309 = vrot.slane %v267, 1
        %v310 = vrot.slane %v268, 1
        %v311 = vsel %vm299, %v309, %v310
        %v312 = vrot.slane %v269, 1
        %v313 = vrot.slane %v270, 1
        %v314 = vsel %vm299, %v312, %v313
        %v315 = vrot.slane %v271, 1
        %v316 = vrot.slane %v272, 1
        %v317 = vsel %vm299, %v315, %v316
        %v318 = vrot.slane %v273, 1
        %v319 = vrot.slane %v274, 1
        %v320 = vsel %vm299, %v318, %v319
        %v321 = vrot.slane %v275, 1
        %v322 = vrot.slane %v276, 1
        %v323 = vsel %vm299, %v321, %v322
        %s324 = scalar_lea.vmem %s1, 32
        %v325 = vld [vmem:[%s324] sm:$0xff]
        %v326 = vld [vmem:[%s324 + $0x8] sm:$0xff]
        %v327 = vld [vmem:[%s324 + $0x10] sm:$0xff]
        %v328 = vld [vmem:[%s324 + $0x18] sm:$0xff]
        %vm329 = vcmask 261120
        %v330 = vsel %vm329, %v302, 0
        %v332 = vsel %vm329, %v305, 0
        %v334 = vsel %vm329, %v308, 0
        %v336 = vsel %vm329, %v311, 0
        %v338 = vsel %vm329, %v314, 0
        %v340 = vsel %vm329, %v317, 0
        %v342 = vsel %vm329, %v320, 0
        %v344 = vsel %vm329, %v323, 0
        %346 = vmatprep.subr.mxu0 0.0
        %347 = vmatpush1.msra.mxu0 %v325
        %348 = vmatprep.subr.mxu0 0.0
        %349 = vmatpush1.msra.mxu0 %v326
        %350 = vmatprep.subr.mxu0 0.0
        %351 = vmatpush1.msra.mxu0 %v327
        %352 = vmatprep.subr.mxu0 0.0
        %353 = vmatpush1.msra.mxu0 %v328
        %354 = vmatprep.subr.mxu0 0.0
        %355 = vmatpush1.msra.mxu0 0.0
        %356 = vmatprep.subr.mxu0 0.0
        %357 = vmatpush1.msra.mxu0 0.0
        %358 = vmatprep.subr.mxu0 0.0
        %359 = vmatpush1.msra.mxu0 0.0
        %360 = vmatprep.subr.mxu0 0.0
        %361 = vmatpush1.msra.mxu0 0.0
        %362 = vmatprep.subr.mxu0 0.0
        %363 = vmatpush1.msra.mxu0 0.0
        %364 = vmatprep.subr.mxu0 0.0
        %365 = vmatpush1.msra.mxu0 0.0
        %366 = vmatprep.subr.mxu0 0.0
        %367 = vmatpush1.msra.mxu0 0.0
        %368 = vmatprep.subr.mxu0 0.0
        %369 = vmatpush1.msra.mxu0 0.0
        %370 = vmatprep.subr.mxu0 0.0
        %371 = vmatpush1.msra.mxu0 0.0
        %372 = vmatprep.subr.mxu0 0.0
        %373 = vmatpush1.msra.mxu0 0.0
        %374 = vmatprep.subr.mxu0 0.0
        %375 = vmatpush1.msra.mxu0 0.0
        %376 = vmatprep.subr.mxu0 0.0
        %377 = vmatpush1.msra.mxu0 0.0
        %378 = vmatprep.subr.mxu0 0.0
        %379 = vmatpush1.msra.mxu0 0.0
        %380 = vmatprep.subr.mxu0 0.0
        %381 = vmatpush1.msra.mxu0 0.0
        %382 = vmatprep.subr.mxu0 0.0
        %383 = vmatpush1.msra.mxu0 0.0
        %384 = vmatprep.subr.mxu0 0.0
        %385 = vmatpush1.msra.mxu0 0.0
        %386 = vmatprep.subr.mxu0 0.0
        %387 = vmatpush1.msra.mxu0 0.0
        %388 = vmatprep.subr.mxu0 0.0
        %389 = vmatpush1.msra.mxu0 0.0
        %390 = vmatprep.subr.mxu0 0.0
        %391 = vmatpush1.msra.mxu0 0.0
        %392 = vmatprep.subr.mxu0 0.0
        %393 = vmatpush1.msra.mxu0 0.0
        %394 = vmatprep.subr.mxu0 0.0
        %395 = vmatpush1.msra.mxu0 0.0
        %396 = vmatprep.subr.mxu0 0.0
        %397 = vmatpush1.msra.mxu0 0.0
        %398 = vmatprep.subr.mxu0 0.0
        %399 = vmatpush1.msra.mxu0 0.0
        %400 = vmatprep.subr.mxu0 0.0
        %401 = vmatpush1.msra.mxu0 0.0
        %402 = vmatprep.subr.mxu0 0.0
        %403 = vmatpush1.msra.mxu0 0.0
        %404 = vmatprep.subr.mxu0 0.0
        %405 = vmatpush1.msra.mxu0 0.0
        %406 = vmatprep.subr.mxu0 0.0
        %407 = vmatpush1.msra.mxu0 0.0
        %408 = vmatprep.subr.mxu0 0.0
        %409 = vmatpush1.msra.mxu0 0.0
        %410 = vmatprep.mubr.f32.mxu0 0.0
        %411 = vmatmul.mubr.f32.gmra.mrb[0].mxu0 %v330
        %v412 = vpop.f32.mrb[0].mxu0
        %v413 = vadd.f32 0.0, %v412
        %v414 = vpop.f32.mrb[0].mxu0
        %415 = vmatprep.mubr.f32.mxu0 0.0
        %416 = vmatmul.mubr.f32.gmra.mrb[0].mxu0 %v332
        %v417 = vpop.f32.mrb[0].mxu0
        %v418 = vadd.f32 0.0, %v417
        %v419 = vpop.f32.mrb[0].mxu0
        %420 = vmatprep.mubr.f32.mxu0 0.0
        %421 = vmatmul.mubr.f32.gmra.mrb[0].mxu0 %v334
        %v422 = vpop.f32.mrb[0].mxu0
        %v423 = vadd.f32 0.0, %v422
        %v424 = vpop.f32.mrb[0].mxu0
        %425 = vmatprep.mubr.f32.mxu0 0.0
        %426 = vmatmul.mubr.f32.gmra.mrb[0].mxu0 %v336
        %v427 = vpop.f32.mrb[0].mxu0
        %v428 = vadd.f32 0.0, %v427
        %v429 = vpop.f32.mrb[0].mxu0
        %430 = vmatprep.mubr.f32.mxu0 0.0
        %431 = vmatmul.mubr.f32.gmra.mrb[0].mxu0 %v338
        %v432 = vpop.f32.mrb[0].mxu0
        %v433 = vadd.f32 0.0, %v432
        %v434 = vpop.f32.mrb[0].mxu0
        %435 = vmatprep.mubr.f32.mxu0 0.0
        %436 = vmatmul.mubr.f32.gmra.mrb[0].mxu0 %v340
        %v437 = vpop.f32.mrb[0].mxu0
        %v438 = vadd.f32 0.0, %v437
        %v439 = vpop.f32.mrb[0].mxu0
        %440 = vmatprep.mubr.f32.mxu0 0.0
        %441 = vmatmul.mubr.f32.gmra.mrb[0].mxu0 %v342
        %v442 = vpop.f32.mrb[0].mxu0
        %v443 = vadd.f32 0.0, %v442
        %v444 = vpop.f32.mrb[0].mxu0
        %445 = vmatprep.mubr.f32.mxu0 0.0
        %446 = vmatmul.mubr.f32.gmra.mrb[0].mxu0 %v344
        %v447 = vpop.f32.mrb[0].mxu0
        %v448 = vadd.f32 0.0, %v447
        %v449 = vpop.f32.mrb[0].mxu0
        %450 = vdwg.mxu0
        %v451 = vsel %vm329, %v261, 0
        %v453 = vsel %vm329, %v263, 0
        %v455 = vsel %vm329, %v265, 0
        %v457 = vsel %vm329, %v267, 0
        %v459 = vsel %vm329, %v269, 0
        %v461 = vsel %vm329, %v271, 0
        %v463 = vsel %vm329, %v273, 0
        %v465 = vsel %vm329, %v275, 0
        %467 = vmatprep.subr.mxu0 0.0
        %468 = vmatpush1.msra.mxu0 %v279
        %469 = vmatprep.subr.mxu0 0.0
        %470 = vmatpush1.msra.mxu0 %v280
        %471 = vmatprep.subr.mxu0 0.0
        %472 = vmatpush1.msra.mxu0 %v281
        %473 = vmatprep.subr.mxu0 0.0
        %474 = vmatpush1.msra.mxu0 %v282
        %475 = vmatprep.subr.mxu0 0.0
        %476 = vmatpush1.msra.mxu0 0.0
        %477 = vmatprep.subr.mxu0 0.0
        %478 = vmatpush1.msra.mxu0 0.0
        %479 = vmatprep.subr.mxu0 0.0
        %480 = vmatpush1.msra.mxu0 0.0
        %481 = vmatprep.subr.mxu0 0.0
        %482 = vmatpush1.msra.mxu0 0.0
        %483 = vmatprep.subr.mxu0 0.0
        %484 = vmatpush1.msra.mxu0 0.0
        %485 = vmatprep.subr.mxu0 0.0
        %486 = vmatpush1.msra.mxu0 0.0
        %487 = vmatprep.subr.mxu0 0.0
        %488 = vmatpush1.msra.mxu0 0.0
        %489 = vmatprep.subr.mxu0 0.0
        %490 = vmatpush1.msra.mxu0 0.0
        %491 = vmatprep.subr.mxu0 0.0
        %492 = vmatpush1.msra.mxu0 0.0
        %493 = vmatprep.subr.mxu0 0.0
        %494 = vmatpush1.msra.mxu0 0.0
        %495 = vmatprep.subr.mxu0 0.0
        %496 = vmatpush1.msra.mxu0 0.0
        %497 = vmatprep.subr.mxu0 0.0
        %498 = vmatpush1.msra.mxu0 0.0
        %499 = vmatprep.subr.mxu0 0.0
        %500 = vmatpush1.msra.mxu0 0.0
        %501 = vmatprep.subr.mxu0 0.0
        %502 = vmatpush1.msra.mxu0 0.0
        %503 = vmatprep.subr.mxu0 0.0
        %504 = vmatpush1.msra.mxu0 0.0
        %505 = vmatprep.subr.mxu0 0.0
        %506 = vmatpush1.msra.mxu0 0.0
        %507 = vmatprep.subr.mxu0 0.0
        %508 = vmatpush1.msra.mxu0 0.0
        %509 = vmatprep.subr.mxu0 0.0
        %510 = vmatpush1.msra.mxu0 0.0
        %511 = vmatprep.subr.mxu0 0.0
        %512 = vmatpush1.msra.mxu0 0.0
        %513 = vmatprep.subr.mxu0 0.0
        %514 = vmatpush1.msra.mxu0 0.0
        %515 = vmatprep.subr.mxu0 0.0
        %516 = vmatpush1.msra.mxu0 0.0
        %517 = vmatprep.subr.mxu0 0.0
        %518 = vmatpush1.msra.mxu0 0.0
        %519 = vmatprep.subr.mxu0 0.0
        %520 = vmatpush1.msra.mxu0 0.0
        %521 = vmatprep.subr.mxu0 0.0
        %522 = vmatpush1.msra.mxu0 0.0
        %523 = vmatprep.subr.mxu0 0.0
        %524 = vmatpush1.msra.mxu0 0.0
        %525 = vmatprep.subr.mxu0 0.0
        %526 = vmatpush1.msra.mxu0 0.0
        %527 = vmatprep.subr.mxu0 0.0
        %528 = vmatpush1.msra.mxu0 0.0
        %529 = vmatprep.subr.mxu0 0.0
        %530 = vmatpush1.msra.mxu0 0.0
        %531 = vmatprep.mubr.f32.mxu0 0.0
        %532 = vmatmul.mubr.f32.gmra.mrb[0].mxu0 %v451
        %v533 = vpop.f32.mrb[0].mxu0
        %v534 = vadd.f32 %v413, %v533
        %v535 = vpop.f32.mrb[0].mxu0
        %536 = vmatprep.mubr.f32.mxu0 0.0
        %537 = vmatmul.mubr.f32.gmra.mrb[0].mxu0 %v453
        %v538 = vpop.f32.mrb[0].mxu0
        %v539 = vadd.f32 %v418, %v538
        %v540 = vpop.f32.mrb[0].mxu0
        %541 = vmatprep.mubr.f32.mxu0 0.0
        %542 = vmatmul.mubr.f32.gmra.mrb[0].mxu0 %v455
        %v543 = vpop.f32.mrb[0].mxu0
        %v544 = vadd.f32 %v423, %v543
        %v545 = vpop.f32.mrb[0].mxu0
        %546 = vmatprep.mubr.f32.mxu0 0.0
        %547 = vmatmul.mubr.f32.gmra.mrb[0].mxu0 %v457
        %v548 = vpop.f32.mrb[0].mxu0
        %v549 = vadd.f32 %v428, %v548
        %v550 = vpop.f32.mrb[0].mxu0
        %551 = vmatprep.mubr.f32.mxu0 0.0
        %552 = vmatmul.mubr.f32.gmra.mrb[0].mxu0 %v459
        %v553 = vpop.f32.mrb[0].mxu0
        %v554 = vadd.f32 %v433, %v553
        %v555 = vpop.f32.mrb[0].mxu0
        %556 = vmatprep.mubr.f32.mxu0 0.0
        %557 = vmatmul.mubr.f32.gmra.mrb[0].mxu0 %v461
        %v558 = vpop.f32.mrb[0].mxu0
        %v559 = vadd.f32 %v438, %v558
        %v560 = vpop.f32.mrb[0].mxu0
        %561 = vmatprep.mubr.f32.mxu0 0.0
        %562 = vmatmul.mubr.f32.gmra.mrb[0].mxu0 %v463
        %v563 = vpop.f32.mrb[0].mxu0
        %v564 = vadd.f32 %v443, %v563
        %v565 = vpop.f32.mrb[0].mxu0
        %566 = vmatprep.mubr.f32.mxu0 0.0
        %567 = vmatmul.mubr.f32.gmra.mrb[0].mxu0 %v465
        %v568 = vpop.f32.mrb[0].mxu0
        %v569 = vadd.f32 %v448, %v568
        %v570 = vpop.f32.mrb[0].mxu0
        %571 = vdwg.mxu0
        %s572 = scalar_lea.vmem %s1, 64
        %v573 = vld [vmem:[%s572] sm:$0xff]
        %v574 = vld [vmem:[%s572 + $0x8] sm:$0xff]
        %v575 = vld [vmem:[%s572 + $0x10] sm:$0xff]
        %v576 = vld [vmem:[%s572 + $0x18] sm:$0xff]
        %v578 = vsel %vm329, %v277, 0
        %580 = vmatprep.subr.mxu0 0.0
        %581 = vmatpush1.msra.mxu0 %v573
        %582 = vmatprep.subr.mxu0 0.0
        %583 = vmatpush1.msra.mxu0 %v574
        %584 = vmatprep.subr.mxu0 0.0
        %585 = vmatpush1.msra.mxu0 %v575
        %586 = vmatprep.subr.mxu0 0.0
        %587 = vmatpush1.msra.mxu0 %v576
        %588 = vmatprep.subr.mxu0 0.0
        %589 = vmatpush1.msra.mxu0 0.0
        %590 = vmatprep.subr.mxu0 0.0
        %591 = vmatpush1.msra.mxu0 0.0
        %592 = vmatprep.subr.mxu0 0.0
        %593 = vmatpush1.msra.mxu0 0.0
        %594 = vmatprep.subr.mxu0 0.0
        %595 = vmatpush1.msra.mxu0 0.0
        %596 = vmatprep.subr.mxu0 0.0
        %597 = vmatpush1.msra.mxu0 0.0
        %598 = vmatprep.subr.mxu0 0.0
        %599 = vmatpush1.msra.mxu0 0.0
        %600 = vmatprep.subr.mxu0 0.0
        %601 = vmatpush1.msra.mxu0 0.0
        %602 = vmatprep.subr.mxu0 0.0
        %603 = vmatpush1.msra.mxu0 0.0
        %604 = vmatprep.subr.mxu0 0.0
        %605 = vmatpush1.msra.mxu0 0.0
        %606 = vmatprep.subr.mxu0 0.0
        %607 = vmatpush1.msra.mxu0 0.0
        %608 = vmatprep.subr.mxu0 0.0
        %609 = vmatpush1.msra.mxu0 0.0
        %610 = vmatprep.subr.mxu0 0.0
        %611 = vmatpush1.msra.mxu0 0.0
        %612 = vmatprep.subr.mxu0 0.0
        %613 = vmatpush1.msra.mxu0 0.0
        %614 = vmatprep.subr.mxu0 0.0
        %615 = vmatpush1.msra.mxu0 0.0
        %616 = vmatprep.subr.mxu0 0.0
        %617 = vmatpush1.msra.mxu0 0.0
        %618 = vmatprep.subr.mxu0 0.0
        %619 = vmatpush1.msra.mxu0 0.0
        %620 = vmatprep.subr.mxu0 0.0
        %621 = vmatpush1.msra.mxu0 0.0
        %622 = vmatprep.subr.mxu0 0.0
        %623 = vmatpush1.msra.mxu0 0.0
        %624 = vmatprep.subr.mxu0 0.0
        %625 = vmatpush1.msra.mxu0 0.0
        %626 = vmatprep.subr.mxu0 0.0
        %627 = vmatpush1.msra.mxu0 0.0
        %628 = vmatprep.subr.mxu0 0.0
        %629 = vmatpush1.msra.mxu0 0.0
        %630 = vmatprep.subr.mxu0 0.0
        %631 = vmatpush1.msra.mxu0 0.0
        %632 = vmatprep.subr.mxu0 0.0
        %633 = vmatpush1.msra.mxu0 0.0
        %634 = vmatprep.subr.mxu0 0.0
        %635 = vmatpush1.msra.mxu0 0.0
        %636 = vmatprep.subr.mxu0 0.0
        %637 = vmatpush1.msra.mxu0 0.0
        %638 = vmatprep.subr.mxu0 0.0
        %639 = vmatpush1.msra.mxu0 0.0
        %640 = vmatprep.subr.mxu0 0.0
        %641 = vmatpush1.msra.mxu0 0.0
        %642 = vmatprep.subr.mxu0 0.0
        %643 = vmatpush1.msra.mxu0 0.0
        %644 = vmatprep.mubr.f32.mxu0 0.0
        %645 = vmatmul.mubr.f32.gmra.mrb[0].mxu0 %v453
        %v646 = vpop.f32.mrb[0].mxu0
        %v647 = vadd.f32 0.0, %v646
        %v648 = vpop.f32.mrb[0].mxu0
        %649 = vmatprep.mubr.f32.mxu0 0.0
        %650 = vmatmul.mubr.f32.gmra.mrb[0].mxu0 %v455
        %v651 = vpop.f32.mrb[0].mxu0
        %v652 = vadd.f32 0.0, %v651
        %v653 = vpop.f32.mrb[0].mxu0
        %654 = vmatprep.mubr.f32.mxu0 0.0
        %655 = vmatmul.mubr.f32.gmra.mrb[0].mxu0 %v457
        %v656 = vpop.f32.mrb[0].mxu0
        %v657 = vadd.f32 0.0, %v656
        %v658 = vpop.f32.mrb[0].mxu0
        %659 = vmatprep.mubr.f32.mxu0 0.0
        %660 = vmatmul.mubr.f32.gmra.mrb[0].mxu0 %v459
        %v661 = vpop.f32.mrb[0].mxu0
        %v662 = vadd.f32 0.0, %v661
        %v663 = vpop.f32.mrb[0].mxu0
        %664 = vmatprep.mubr.f32.mxu0 0.0
        %665 = vmatmul.mubr.f32.gmra.mrb[0].mxu0 %v461
        %v666 = vpop.f32.mrb[0].mxu0
        %v667 = vadd.f32 0.0, %v666
        %v668 = vpop.f32.mrb[0].mxu0
        %669 = vmatprep.mubr.f32.mxu0 0.0
        %670 = vmatmul.mubr.f32.gmra.mrb[0].mxu0 %v463
        %v671 = vpop.f32.mrb[0].mxu0
        %v672 = vadd.f32 0.0, %v671
        %v673 = vpop.f32.mrb[0].mxu0
        %674 = vmatprep.mubr.f32.mxu0 0.0
        %675 = vmatmul.mubr.f32.gmra.mrb[0].mxu0 %v465
        %v676 = vpop.f32.mrb[0].mxu0
        %v677 = vadd.f32 0.0, %v676
        %v678 = vpop.f32.mrb[0].mxu0
        %679 = vmatprep.mubr.f32.mxu0 0.0
        %680 = vmatmul.mubr.f32.gmra.mrb[0].mxu0 %v578
        %v681 = vpop.f32.mrb[0].mxu0
        %v682 = vadd.f32 0.0, %v681
        %v683 = vpop.f32.mrb[0].mxu0
        %684 = vdwg.mxu0
        %v685 = vadd.f32 %v534, %v647
        %v686 = vadd.f32 %v539, %v652
        %v687 = vadd.f32 %v544, %v657
        %v688 = vadd.f32 %v549, %v662
        %v689 = vadd.f32 %v554, %v667
        %v690 = vadd.f32 %v559, %v672
        %v691 = vadd.f32 %v564, %v677
        %v692 = vadd.f32 %v569, %v682
        %v694 = vrot.slane %v277, 1
        %v695 = vrot.slane %v278, 1
        %v696 = vsel %vm299, %v694, %v695
        %s697 = scalar_lea.vmem %s1, 96
        %v698 = vld [vmem:[%s697] sm:$0xff]
        %v699 = vld [vmem:[%s697 + $0x8] sm:$0xff]
        %v700 = vld [vmem:[%s697 + $0x10] sm:$0xff]
        %v701 = vld [vmem:[%s697 + $0x18] sm:$0xff]
        %v702 = vsel %vm329, %v696, 0
        %704 = vmatprep.subr.mxu0 0.0
        %705 = vmatpush1.msra.mxu0 %v698
        %706 = vmatprep.subr.mxu0 0.0
        %707 = vmatpush1.msra.mxu0 %v699
        %708 = vmatprep.subr.mxu0 0.0
        %709 = vmatpush1.msra.mxu0 %v700
        %710 = vmatprep.subr.mxu0 0.0
        %711 = vmatpush1.msra.mxu0 %v701
        %712 = vmatprep.subr.mxu0 0.0
        %713 = vmatpush1.msra.mxu0 0.0
        %714 = vmatprep.subr.mxu0 0.0
        %715 = vmatpush1.msra.mxu0 0.0
        %716 = vmatprep.subr.mxu0 0.0
        %717 = vmatpush1.msra.mxu0 0.0
        %718 = vmatprep.subr.mxu0 0.0
        %719 = vmatpush1.msra.mxu0 0.0
        %720 = vmatprep.subr.mxu0 0.0
        %721 = vmatpush1.msra.mxu0 0.0
        %722 = vmatprep.subr.mxu0 0.0
        %723 = vmatpush1.msra.mxu0 0.0
        %724 = vmatprep.subr.mxu0 0.0
        %725 = vmatpush1.msra.mxu0 0.0
        %726 = vmatprep.subr.mxu0 0.0
        %727 = vmatpush1.msra.mxu0 0.0
        %728 = vmatprep.subr.mxu0 0.0
        %729 = vmatpush1.msra.mxu0 0.0
        %730 = vmatprep.subr.mxu0 0.0
        %731 = vmatpush1.msra.mxu0 0.0
        %732 = vmatprep.subr.mxu0 0.0
        %733 = vmatpush1.msra.mxu0 0.0
        %734 = vmatprep.subr.mxu0 0.0
        %735 = vmatpush1.msra.mxu0 0.0
        %736 = vmatprep.subr.mxu0 0.0
        %737 = vmatpush1.msra.mxu0 0.0
        %738 = vmatprep.subr.mxu0 0.0
        %739 = vmatpush1.msra.mxu0 0.0
        %740 = vmatprep.subr.mxu0 0.0
        %741 = vmatpush1.msra.mxu0 0.0
        %742 = vmatprep.subr.mxu0 0.0
        %743 = vmatpush1.msra.mxu0 0.0
        %744 = vmatprep.subr.mxu0 0.0
        %745 = vmatpush1.msra.mxu0 0.0
        %746 = vmatprep.subr.mxu0 0.0
        %747 = vmatpush1.msra.mxu0 0.0
        %748 = vmatprep.subr.mxu0 0.0
        %749 = vmatpush1.msra.mxu0 0.0
        %750 = vmatprep.subr.mxu0 0.0
        %751 = vmatpush1.msra.mxu0 0.0
        %752 = vmatprep.subr.mxu0 0.0
        %753 = vmatpush1.msra.mxu0 0.0
        %754 = vmatprep.subr.mxu0 0.0
        %755 = vmatpush1.msra.mxu0 0.0
        %756 = vmatprep.subr.mxu0 0.0
        %757 = vmatpush1.msra.mxu0 0.0
        %758 = vmatprep.subr.mxu0 0.0
        %759 = vmatpush1.msra.mxu0 0.0
        %760 = vmatprep.subr.mxu0 0.0
        %761 = vmatpush1.msra.mxu0 0.0
        %762 = vmatprep.subr.mxu0 0.0
        %763 = vmatpush1.msra.mxu0 0.0
        %764 = vmatprep.subr.mxu0 0.0
        %765 = vmatpush1.msra.mxu0 0.0
        %766 = vmatprep.subr.mxu0 0.0
        %767 = vmatpush1.msra.mxu0 0.0
        %768 = vmatprep.mubr.f32.mxu0 0.0
        %769 = vmatmul.mubr.f32.gmra.mrb[0].mxu0 %v332
        %v770 = vpop.f32.mrb[0].mxu0
        %v771 = vadd.f32 0.0, %v770
        %v772 = vpop.f32.mrb[0].mxu0
        %773 = vmatprep.mubr.f32.mxu0 0.0
        %774 = vmatmul.mubr.f32.gmra.mrb[0].mxu0 %v334
        %v775 = vpop.f32.mrb[0].mxu0
        %v776 = vadd.f32 0.0, %v775
        %v777 = vpop.f32.mrb[0].mxu0
        %778 = vmatprep.mubr.f32.mxu0 0.0
        %779 = vmatmul.mubr.f32.gmra.mrb[0].mxu0 %v336
        %v780 = vpop.f32.mrb[0].mxu0
        %v781 = vadd.f32 0.0, %v780
        %v782 = vpop.f32.mrb[0].mxu0
        %783 = vmatprep.mubr.f32.mxu0 0.0
        %784 = vmatmul.mubr.f32.gmra.mrb[0].mxu0 %v338
        %v785 = vpop.f32.mrb[0].mxu0
        %v786 = vadd.f32 0.0, %v785
        %v787 = vpop.f32.mrb[0].mxu0
        %788 = vmatprep.mubr.f32.mxu0 0.0
        %789 = vmatmul.mubr.f32.gmra.mrb[0].mxu0 %v340
        %v790 = vpop.f32.mrb[0].mxu0
        %v791 = vadd.f32 0.0, %v790
        %v792 = vpop.f32.mrb[0].mxu0
        %793 = vmatprep.mubr.f32.mxu0 0.0
        %794 = vmatmul.mubr.f32.gmra.mrb[0].mxu0 %v342
        %v795 = vpop.f32.mrb[0].mxu0
        %v796 = vadd.f32 0.0, %v795
        %v797 = vpop.f32.mrb[0].mxu0
        %798 = vmatprep.mubr.f32.mxu0 0.0
        %799 = vmatmul.mubr.f32.gmra.mrb[0].mxu0 %v344
        %v800 = vpop.f32.mrb[0].mxu0
        %v801 = vadd.f32 0.0, %v800
        %v802 = vpop.f32.mrb[0].mxu0
        %803 = vmatprep.mubr.f32.mxu0 0.0
        %804 = vmatmul.mubr.f32.gmra.mrb[0].mxu0 %v702
        %v805 = vpop.f32.mrb[0].mxu0
        %v806 = vadd.f32 0.0, %v805
        %v807 = vpop.f32.mrb[0].mxu0
        %808 = vdwg.mxu0
        %v809 = vadd.f32 %v685, %v771
        %v810 = vadd.f32 %v686, %v776
        %v811 = vadd.f32 %v687, %v781
        %v812 = vadd.f32 %v688, %v786
        %v813 = vadd.f32 %v689, %v791
        %v814 = vadd.f32 %v690, %v796
        %v815 = vadd.f32 %v691, %v801
        %v816 = vadd.f32 %v692, %v806
        %v817 = vmax.f32 %v809, 0.0
        %v818 = vmax.f32 %v810, 0.0
        %v819 = vmax.f32 %v811, 0.0
        %v820 = vmax.f32 %v812, 0.0
        %v821 = vmax.f32 %v813, 0.0
        %v822 = vmax.f32 %v814, 0.0
        %v823 = vmax.f32 %v815, 0.0
        %v824 = vmax.f32 %v816, 0.0
        %vm825 = vcmask 64512
        %826 = vst.msk [vmem:[#allocation2] sm:$0xff] %vm825, 0.0
        %827 = vst.msk [vmem:[#allocation2 + $0x8] sm:$0xff] %vm825, 0.0
        %vm828 = vcmask 57344
        %829 = vst.msk [vmem:[#allocation2 + $0x10] sm:$0x1] %vm828, 0.0
        %830 = vst.msk [vmem:[#allocation2 + $0x18] sm:$0xff] %vm825, 0.0
        %831 = vst.msk [vmem:[#allocation2 + $0x20] sm:$0xff] %vm825, 0.0
        %832 = vst.msk [vmem:[#allocation2 + $0x28] sm:$0x1] %vm828, 0.0
        %833 = vst.msk [vmem:[#allocation2 + $0x30] sm:$0xff] %vm825, 0.0
        %834 = vst.msk [vmem:[#allocation2 + $0x38] sm:$0xff] %vm825, 0.0
        %835 = vst.msk [vmem:[#allocation2 + $0x40] sm:$0x1] %vm828, 0.0
        %836 = vst.msk [vmem:[#allocation2 + $0x48] sm:$0xff] %vm825, 0.0
        %837 = vst.msk [vmem:[#allocation2 + $0x50] sm:$0xff] %vm825, 0.0
        %838 = vst.msk [vmem:[#allocation2 + $0x58] sm:$0x1] %vm828, 0.0
        %839 = vst.msk [vmem:[#allocation2 + $0x60] sm:$0xff] %vm825, 0.0
        %840 = vst.msk [vmem:[#allocation2 + $0x68] sm:$0xff] %vm825, 0.0
        %841 = vst.msk [vmem:[#allocation2 + $0x70] sm:$0x1] %vm828, 0.0
        %842 = vst.msk [vmem:[#allocation2 + $0x78] sm:$0xff] %vm825, 0.0
        %843 = vst.msk [vmem:[#allocation2 + $0x80] sm:$0xff] %vm825, 0.0
        %844 = vst.msk [vmem:[#allocation2 + $0x88] sm:$0x1] %vm828, 0.0
        %845 = vst.msk [vmem:[#allocation2 + $0x90] sm:$0xff] %vm825, 0.0
        %846 = vst.msk [vmem:[#allocation2 + $0x98] sm:$0xff] %vm825, 0.0
        %847 = vst.msk [vmem:[#allocation2 + $0xa0] sm:$0x1] %vm828, 0.0
        %848 = vst.msk [vmem:[#allocation2 + $0xa8] sm:$0xff] %vm825, 0.0
        %849 = vst.msk [vmem:[#allocation2 + $0xb0] sm:$0xff] %vm825, 0.0
        %850 = vst.msk [vmem:[#allocation2 + $0xb8] sm:$0x1] %vm828, 0.0
        %851 = vst.msk [vmem:[#allocation2 + $0xc0] sm:$0xff] %vm825, 0.0
        %852 = vst.msk [vmem:[#allocation2 + $0xc8] sm:$0xff] %vm825, 0.0
        %853 = vst.msk [vmem:[#allocation2 + $0xd0] sm:$0x1] %vm828, 0.0
        %854 = vst.msk [vmem:[#allocation2 + $0xd8] sm:$0xff] %vm825, 0.0
        %855 = vst.msk [vmem:[#allocation2 + $0xe0] sm:$0xff] %vm825, 0.0
        %856 = vst.msk [vmem:[#allocation2 + $0xe8] sm:$0x1] %vm828, 0.0
        %s857 = scalar_lea.vmem [#allocation2], 24
        %858 = vst.msk [vmem:[%s857 + $0x1] sm:$0xff] %vm825, %v817
        %859 = vst.msk [vmem:[%s857 + $0x19] sm:$0xff] %vm825, %v818
        %860 = vst.msk [vmem:[%s857 + $0x31] sm:$0xff] %vm825, %v819
        %861 = vst.msk [vmem:[%s857 + $0x49] sm:$0xff] %vm825, %v820
        %862 = vst.msk [vmem:[%s857 + $0x61] sm:$0xff] %vm825, %v821
        %863 = vst.msk [vmem:[%s857 + $0x79] sm:$0xff] %vm825, %v822
        %864 = vst.msk [vmem:[%s857 + $0x91] sm:$0xff] %vm825, %v823
        %865 = vst.msk [vmem:[%s857 + $0xa9] sm:$0xff] %vm825, %v824
        %v866 = vld [vmem:[#allocation2] sm:$0xff]
        %v867 = vld [vmem:[#allocation2 + $0x8] sm:$0xff]
        %v868 = vld [vmem:[#allocation2 + $0x18] sm:$0xff]
        %v869 = vld [vmem:[#allocation2 + $0x20] sm:$0xff]
        %v870 = vld [vmem:[#allocation2 + $0x30] sm:$0xff]
        %v871 = vld [vmem:[#allocation2 + $0x38] sm:$0xff]
        %v872 = vld [vmem:[#allocation2 + $0x48] sm:$0xff]
        %v873 = vld [vmem:[#allocation2 + $0x50] sm:$0xff]
        %v874 = vld [vmem:[#allocation2 + $0x60] sm:$0xff]
        %v875 = vld [vmem:[#allocation2 + $0x68] sm:$0xff]
        %v876 = vld [vmem:[#allocation2 + $0x78] sm:$0xff]
        %v877 = vld [vmem:[#allocation2 + $0x80] sm:$0xff]
        %v878 = vld [vmem:[#allocation2 + $0x90] sm:$0xff]
        %v879 = vld [vmem:[#allocation2 + $0x98] sm:$0xff]
        %v880 = vld [vmem:[#allocation2 + $0xa8] sm:$0xff]
        %v881 = vld [vmem:[#allocation2 + $0xb0] sm:$0xff]
        %v882 = vld [vmem:[#allocation2 + $0xc0] sm:$0xff]
        %v883 = vld [vmem:[#allocation2 + $0xc8] sm:$0xff]
        %v884 = vld [vmem:[%s2] sm:$0xff]
        %v885 = vld [vmem:[#allocation2 + $0x1] sm:$0xff]
        %v886 = vld [vmem:[#allocation2 + $0x9] sm:$0xff]
        %v887 = vld [vmem:[#allocation2 + $0x19] sm:$0xff]
        %v888 = vld [vmem:[#allocation2 + $0x21] sm:$0xff]
        %v889 = vld [vmem:[#allocation2 + $0x31] sm:$0xff]
        %v890 = vld [vmem:[#allocation2 + $0x39] sm:$0xff]
        %v891 = vld [vmem:[#allocation2 + $0x49] sm:$0xff]
        %v892 = vld [vmem:[#allocation2 + $0x51] sm:$0xff]
        %v893 = vld [vmem:[#allocation2 + $0x61] sm:$0xff]
        %v894 = vld [vmem:[#allocation2 + $0x69] sm:$0xff]
        %v895 = vld [vmem:[#allocation2 + $0x79] sm:$0xff]
        %v896 = vld [vmem:[#allocation2 + $0x81] sm:$0xff]
        %v897 = vld [vmem:[#allocation2 + $0x91] sm:$0xff]
        %v898 = vld [vmem:[#allocation2 + $0x99] sm:$0xff]
        %v899 = vld [vmem:[#allocation2 + $0xa9] sm:$0xff]
        %v900 = vld [vmem:[#allocation2 + $0xb1] sm:$0xff]
        %v901 = vld [vmem:[#allocation2 + $0xc1] sm:$0xff]
        %v902 = vld [vmem:[#allocation2 + $0xc9] sm:$0xff]
        %s903 = scalar_lea.vmem %s2, 8
        %v904 = vld [vmem:[%s903] sm:$0xff]
        %v906 = vsel %vm825, %v885, 0
        %v909 = vsel %vm825, %v886, 0
        %v912 = vsel %vm825, %v887, 0
        %v915 = vsel %vm825, %v888, 0
        %v918 = vsel %vm825, %v889, 0
        %v921 = vsel %vm825, %v890, 0
        %v924 = vsel %vm825, %v891, 0
        %v927 = vsel %vm825, %v892, 0
        %v930 = vsel %vm825, %v893, 0
        %v933 = vsel %vm825, %v894, 0
        %v936 = vsel %vm825, %v895, 0
        %v939 = vsel %vm825, %v896, 0
        %v942 = vsel %vm825, %v897, 0
        %v945 = vsel %vm825, %v898, 0
        %v948 = vsel %vm825, %v899, 0
        %v951 = vsel %vm825, %v900, 0
        %v954 = vsel %vm825, %v901, 0
        %v957 = vsel %vm825, %v902, 0
        %959 = vmatprep.subr.mxu0 0.0
        %960 = vmatpush1.msra.mxu0 %v904
        %961 = vmatprep.subr.mxu0 0.0
        %962 = vmatpush1.msra.mxu0 0.0
        %963 = vmatprep.subr.mxu0 0.0
        %964 = vmatpush1.msra.mxu0 0.0
        %965 = vmatprep.subr.mxu0 0.0
        %966 = vmatpush1.msra.mxu0 0.0
        %967 = vmatprep.subr.mxu0 0.0
        %968 = vmatpush1.msra.mxu0 0.0
        %969 = vmatprep.subr.mxu0 0.0
        %970 = vmatpush1.msra.mxu0 0.0
        %971 = vmatprep.subr.mxu0 0.0
        %972 = vmatpush1.msra.mxu0 0.0
        %973 = vmatprep.subr.mxu0 0.0
        %974 = vmatpush1.msra.mxu0 0.0
        %975 = vmatprep.subr.mxu0 0.0
        %976 = vmatpush1.msra.mxu0 0.0
        %977 = vmatprep.subr.mxu0 0.0
        %978 = vmatpush1.msra.mxu0 0.0
        %979 = vmatprep.subr.mxu0 0.0
        %980 = vmatpush1.msra.mxu0 0.0
        %981 = vmatprep.subr.mxu0 0.0
        %982 = vmatpush1.msra.mxu0 0.0
        %983 = vmatprep.subr.mxu0 0.0
        %984 = vmatpush1.msra.mxu0 0.0
        %985 = vmatprep.subr.mxu0 0.0
        %986 = vmatpush1.msra.mxu0 0.0
        %987 = vmatprep.subr.mxu0 0.0
        %988 = vmatpush1.msra.mxu0 0.0
        %989 = vmatprep.subr.mxu0 0.0
        %990 = vmatpush1.msra.mxu0 0.0
        %991 = vmatprep.subr.mxu0 0.0
        %992 = vmatpush1.msra.mxu0 0.0
        %993 = vmatprep.subr.mxu0 0.0
        %994 = vmatpush1.msra.mxu0 0.0
        %995 = vmatprep.subr.mxu0 0.0
        %996 = vmatpush1.msra.mxu0 0.0
        %997 = vmatprep.subr.mxu0 0.0
        %998 = vmatpush1.msra.mxu0 0.0
        %999 = vmatprep.subr.mxu0 0.0
        %1000 = vmatpush1.msra.mxu0 0.0
        %1001 = vmatprep.subr.mxu0 0.0
        %1002 = vmatpush1.msra.mxu0 0.0
        %1003 = vmatprep.subr.mxu0 0.0
        %1004 = vmatpush1.msra.mxu0 0.0
        %1005 = vmatprep.subr.mxu0 0.0
        %1006 = vmatpush1.msra.mxu0 0.0
        %1007 = vmatprep.subr.mxu0 0.0
        %1008 = vmatpush1.msra.mxu0 0.0
        %1009 = vmatprep.subr.mxu0 0.0
        %1010 = vmatpush1.msra.mxu0 0.0
        %1011 = vmatprep.subr.mxu0 0.0
        %1012 = vmatpush1.msra.mxu0 0.0
        %1013 = vmatprep.subr.mxu0 0.0
        %1014 = vmatpush1.msra.mxu0 0.0
        %1015 = vmatprep.subr.mxu0 0.0
        %1016 = vmatpush1.msra.mxu0 0.0
        %1017 = vmatprep.subr.mxu0 0.0
        %1018 = vmatpush1.msra.mxu0 0.0
        %1019 = vmatprep.subr.mxu0 0.0
        %1020 = vmatpush1.msra.mxu0 0.0
        %1021 = vmatprep.subr.mxu0 0.0
        %1022 = vmatpush1.msra.mxu0 0.0
        %1023 = vmatprep.mubr.f32.mxu0 0.0
        %1024 = vmatmul.mubr.f32.gmra.mrb[0].mxu0 %v906
        %v1025 = vpop.f32.mrb[0].mxu0
        %v1026 = vadd.f32 0.0, %v1025
        %v1027 = vpop.f32.mrb[0].mxu0
        %1028 = vmatprep.mubr.f32.mxu0 0.0
        %1029 = vmatmul.mubr.f32.gmra.mrb[0].mxu0 %v909
        %v1030 = vpop.f32.mrb[0].mxu0
        %v1031 = vadd.f32 0.0, %v1030
        %v1032 = vpop.f32.mrb[0].mxu0
        %1033 = vmatprep.mubr.f32.mxu0 0.0
        %1034 = vmatmul.mubr.f32.gmra.mrb[0].mxu0 %v912
        %v1035 = vpop.f32.mrb[0].mxu0
        %v1036 = vadd.f32 0.0, %v1035
        %v1037 = vpop.f32.mrb[0].mxu0
        %1038 = vmatprep.mubr.f32.mxu0 0.0
        %1039 = vmatmul.mubr.f32.gmra.mrb[0].mxu0 %v915
        %v1040 = vpop.f32.mrb[0].mxu0
        %v1041 = vadd.f32 0.0, %v1040
        %v1042 = vpop.f32.mrb[0].mxu0
        %1043 = vmatprep.mubr.f32.mxu0 0.0
        %1044 = vmatmul.mubr.f32.gmra.mrb[0].mxu0 %v918
        %v1045 = vpop.f32.mrb[0].mxu0
        %v1046 = vadd.f32 0.0, %v1045
        %v1047 = vpop.f32.mrb[0].mxu0
        %1048 = vmatprep.mubr.f32.mxu0 0.0
        %1049 = vmatmul.mubr.f32.gmra.mrb[0].mxu0 %v921
        %v1050 = vpop.f32.mrb[0].mxu0
        %v1051 = vadd.f32 0.0, %v1050
        %v1052 = vpop.f32.mrb[0].mxu0
        %1053 = vmatprep.mubr.f32.mxu0 0.0
        %1054 = vmatmul.mubr.f32.gmra.mrb[0].mxu0 %v924
        %v1055 = vpop.f32.mrb[0].mxu0
        %v1056 = vadd.f32 0.0, %v1055
        %v1057 = vpop.f32.mrb[0].mxu0
        %1058 = vmatprep.mubr.f32.mxu0 0.0
        %1059 = vmatmul.mubr.f32.gmra.mrb[0].mxu0 %v927
        %v1060 = vpop.f32.mrb[0].mxu0
        %v1061 = vadd.f32 0.0, %v1060
        %v1062 = vpop.f32.mrb[0].mxu0
        %1063 = vmatprep.mubr.f32.mxu0 0.0
        %1064 = vmatmul.mubr.f32.gmra.mrb[0].mxu0 %v930
        %v1065 = vpop.f32.mrb[0].mxu0
        %v1066 = vadd.f32 0.0, %v1065
        %v1067 = vpop.f32.mrb[0].mxu0
        %1068 = vmatprep.mubr.f32.mxu0 0.0
        %1069 = vmatmul.mubr.f32.gmra.mrb[0].mxu0 %v933
        %v1070 = vpop.f32.mrb[0].mxu0
        %v1071 = vadd.f32 0.0, %v1070
        %v1072 = vpop.f32.mrb[0].mxu0
        %1073 = vmatprep.mubr.f32.mxu0 0.0
        %1074 = vmatmul.mubr.f32.gmra.mrb[0].mxu0 %v936
        %v1075 = vpop.f32.mrb[0].mxu0
        %v1076 = vadd.f32 0.0, %v1075
        %v1077 = vpop.f32.mrb[0].mxu0
        %1078 = vmatprep.mubr.f32.mxu0 0.0
        %1079 = vmatmul.mubr.f32.gmra.mrb[0].mxu0 %v939
        %v1080 = vpop.f32.mrb[0].mxu0
        %v1081 = vadd.f32 0.0, %v1080
        %v1082 = vpop.f32.mrb[0].mxu0
        %1083 = vmatprep.mubr.f32.mxu0 0.0
        %1084 = vmatmul.mubr.f32.gmra.mrb[0].mxu0 %v942
        %v1085 = vpop.f32.mrb[0].mxu0
        %v1086 = vadd.f32 0.0, %v1085
        %v1087 = vpop.f32.mrb[0].mxu0
        %1088 = vmatprep.mubr.f32.mxu0 0.0
        %1089 = vmatmul.mubr.f32.gmra.mrb[0].mxu0 %v945
        %v1090 = vpop.f32.mrb[0].mxu0
        %v1091 = vadd.f32 0.0, %v1090
        %v1092 = vpop.f32.mrb[0].mxu0
        %1093 = vmatprep.mubr.f32.mxu0 0.0
        %1094 = vmatmul.mubr.f32.gmra.mrb[0].mxu0 %v948
        %v1095 = vpop.f32.mrb[0].mxu0
        %v1096 = vadd.f32 0.0, %v1095
        %v1097 = vpop.f32.mrb[0].mxu0
        %1098 = vmatprep.mubr.f32.mxu0 0.0
        %1099 = vmatmul.mubr.f32.gmra.mrb[0].mxu0 %v951
        %v1100 = vpop.f32.mrb[0].mxu0
        %v1101 = vadd.f32 0.0, %v1100
        %v1102 = vpop.f32.mrb[0].mxu0
        %1103 = vmatprep.mubr.f32.mxu0 0.0
        %1104 = vmatmul.mubr.f32.gmra.mrb[0].mxu0 %v954
        %v1105 = vpop.f32.mrb[0].mxu0
        %v1106 = vadd.f32 0.0, %v1105
        %v1107 = vpop.f32.mrb[0].mxu0
        %1108 = vmatprep.mubr.f32.mxu0 0.0
        %1109 = vmatmul.mubr.f32.gmra.mrb[0].mxu0 %v957
        %v1110 = vpop.f32.mrb[0].mxu0
        %v1111 = vadd.f32 0.0, %v1110
        %v1112 = vpop.f32.mrb[0].mxu0
        %1113 = vdwg.mxu0
        %v1115 = vsel %vm825, %v866, 0
        %v1118 = vsel %vm825, %v867, 0
        %v1121 = vsel %vm825, %v868, 0
        %v1124 = vsel %vm825, %v869, 0
        %v1127 = vsel %vm825, %v870, 0
        %v1130 = vsel %vm825, %v871, 0
        %v1133 = vsel %vm825, %v872, 0
        %v1136 = vsel %vm825, %v873, 0
        %v1139 = vsel %vm825, %v874, 0
        %v1142 = vsel %vm825, %v875, 0
        %v1145 = vsel %vm825, %v876, 0
        %v1148 = vsel %vm825, %v877, 0
        %v1151 = vsel %vm825, %v878, 0
        %v1154 = vsel %vm825, %v879, 0
        %v1157 = vsel %vm825, %v880, 0
        %v1160 = vsel %vm825, %v881, 0
        %v1163 = vsel %vm825, %v882, 0
        %v1166 = vsel %vm825, %v883, 0
        %1168 = vmatprep.subr.mxu0 0.0
        %1169 = vmatpush1.msra.mxu0 %v884
        %1170 = vmatprep.subr.mxu0 0.0
        %1171 = vmatpush1.msra.mxu0 0.0
        %1172 = vmatprep.subr.mxu0 0.0
        %1173 = vmatpush1.msra.mxu0 0.0
        %1174 = vmatprep.subr.mxu0 0.0
        %1175 = vmatpush1.msra.mxu0 0.0
        %1176 = vmatprep.subr.mxu0 0.0
        %1177 = vmatpush1.msra.mxu0 0.0
        %1178 = vmatprep.subr.mxu0 0.0
        %1179 = vmatpush1.msra.mxu0 0.0
        %1180 = vmatprep.subr.mxu0 0.0
        %1181 = vmatpush1.msra.mxu0 0.0
        %1182 = vmatprep.subr.mxu0 0.0
        %1183 = vmatpush1.msra.mxu0 0.0
        %1184 = vmatprep.subr.mxu0 0.0
        %1185 = vmatpush1.msra.mxu0 0.0
        %1186 = vmatprep.subr.mxu0 0.0
        %1187 = vmatpush1.msra.mxu0 0.0
        %1188 = vmatprep.subr.mxu0 0.0
        %1189 = vmatpush1.msra.mxu0 0.0
        %1190 = vmatprep.subr.mxu0 0.0
        %1191 = vmatpush1.msra.mxu0 0.0
        %1192 = vmatprep.subr.mxu0 0.0
        %1193 = vmatpush1.msra.mxu0 0.0
        %1194 = vmatprep.subr.mxu0 0.0
        %1195 = vmatpush1.msra.mxu0 0.0
        %1196 = vmatprep.subr.mxu0 0.0
        %1197 = vmatpush1.msra.mxu0 0.0
        %1198 = vmatprep.subr.mxu0 0.0
        %1199 = vmatpush1.msra.mxu0 0.0
        %1200 = vmatprep.subr.mxu0 0.0
        %1201 = vmatpush1.msra.mxu0 0.0
        %1202 = vmatprep.subr.mxu0 0.0
        %1203 = vmatpush1.msra.mxu0 0.0
        %1204 = vmatprep.subr.mxu0 0.0
        %1205 = vmatpush1.msra.mxu0 0.0
        %1206 = vmatprep.subr.mxu0 0.0
        %1207 = vmatpush1.msra.mxu0 0.0
        %1208 = vmatprep.subr.mxu0 0.0
        %1209 = vmatpush1.msra.mxu0 0.0
        %1210 = vmatprep.subr.mxu0 0.0
        %1211 = vmatpush1.msra.mxu0 0.0
        %1212 = vmatprep.subr.mxu0 0.0
        %1213 = vmatpush1.msra.mxu0 0.0
        %1214 = vmatprep.subr.mxu0 0.0
        %1215 = vmatpush1.msra.mxu0 0.0
        %1216 = vmatprep.subr.mxu0 0.0
        %1217 = vmatpush1.msra.mxu0 0.0
        %1218 = vmatprep.subr.mxu0 0.0
        %1219 = vmatpush1.msra.mxu0 0.0
        %1220 = vmatprep.subr.mxu0 0.0
        %1221 = vmatpush1.msra.mxu0 0.0
        %1222 = vmatprep.subr.mxu0 0.0
        %1223 = vmatpush1.msra.mxu0 0.0
        %1224 = vmatprep.subr.mxu0 0.0
        %1225 = vmatpush1.msra.mxu0 0.0
        %1226 = vmatprep.subr.mxu0 0.0
        %1227 = vmatpush1.msra.mxu0 0.0
        %1228 = vmatprep.subr.mxu0 0.0
        %1229 = vmatpush1.msra.mxu0 0.0
        %1230 = vmatprep.subr.mxu0 0.0
        %1231 = vmatpush1.msra.mxu0 0.0
        %1232 = vmatprep.mubr.f32.mxu0 0.0
        %1233 = vmatmul.mubr.f32.gmra.mrb[0].mxu0 %v1115
        %v1234 = vpop.f32.mrb[0].mxu0
        %v1235 = vadd.f32 %v1026, %v1234
        %v1236 = vpop.f32.mrb[0].mxu0
        %1237 = vmatprep.mubr.f32.mxu0 0.0
        %1238 = vmatmul.mubr.f32.gmra.mrb[0].mxu0 %v1118
        %v1239 = vpop.f32.mrb[0].mxu0
        %v1240 = vadd.f32 %v1031, %v1239
        %v1241 = vpop.f32.mrb[0].mxu0
        %1242 = vmatprep.mubr.f32.mxu0 0.0
        %1243 = vmatmul.mubr.f32.gmra.mrb[0].mxu0 %v1121
        %v1244 = vpop.f32.mrb[0].mxu0
        %v1245 = vadd.f32 %v1036, %v1244
        %v1246 = vpop.f32.mrb[0].mxu0
        %1247 = vmatprep.mubr.f32.mxu0 0.0
        %1248 = vmatmul.mubr.f32.gmra.mrb[0].mxu0 %v1124
        %v1249 = vpop.f32.mrb[0].mxu0
        %v1250 = vadd.f32 %v1041, %v1249
        %v1251 = vpop.f32.mrb[0].mxu0
        %1252 = vmatprep.mubr.f32.mxu0 0.0
        %1253 = vmatmul.mubr.f32.gmra.mrb[0].mxu0 %v1127
        %v1254 = vpop.f32.mrb[0].mxu0
        %v1255 = vadd.f32 %v1046, %v1254
        %v1256 = vpop.f32.mrb[0].mxu0
        %1257 = vmatprep.mubr.f32.mxu0 0.0
        %1258 = vmatmul.mubr.f32.gmra.mrb[0].mxu0 %v1130
        %v1259 = vpop.f32.mrb[0].mxu0
        %v1260 = vadd.f32 %v1051, %v1259
        %v1261 = vpop.f32.mrb[0].mxu0
        %1262 = vmatprep.mubr.f32.mxu0 0.0
        %1263 = vmatmul.mubr.f32.gmra.mrb[0].mxu0 %v1133
        %v1264 = vpop.f32.mrb[0].mxu0
        %v1265 = vadd.f32 %v1056, %v1264
        %v1266 = vpop.f32.mrb[0].mxu0
        %1267 = vmatprep.mubr.f32.mxu0 0.0
        %1268 = vmatmul.mubr.f32.gmra.mrb[0].mxu0 %v1136
        %v1269 = vpop.f32.mrb[0].mxu0
        %v1270 = vadd.f32 %v1061, %v1269
        %v1271 = vpop.f32.mrb[0].mxu0
        %1272 = vmatprep.mubr.f32.mxu0 0.0
        %1273 = vmatmul.mubr.f32.gmra.mrb[0].mxu0 %v1139
        %v1274 = vpop.f32.mrb[0].mxu0
        %v1275 = vadd.f32 %v1066, %v1274
        %v1276 = vpop.f32.mrb[0].mxu0
        %1277 = vmatprep.mubr.f32.mxu0 0.0
        %1278 = vmatmul.mubr.f32.gmra.mrb[0].mxu0 %v1142
        %v1279 = vpop.f32.mrb[0].mxu0
        %v1280 = vadd.f32 %v1071, %v1279
        %v1281 = vpop.f32.mrb[0].mxu0
        %1282 = vmatprep.mubr.f32.mxu0 0.0
        %1283 = vmatmul.mubr.f32.gmra.mrb[0].mxu0 %v1145
        %v1284 = vpop.f32.mrb[0].mxu0
        %v1285 = vadd.f32 %v1076, %v1284
        %v1286 = vpop.f32.mrb[0].mxu0
        %1287 = vmatprep.mubr.f32.mxu0 0.0
        %1288 = vmatmul.mubr.f32.gmra.mrb[0].mxu0 %v1148
        %v1289 = vpop.f32.mrb[0].mxu0
        %v1290 = vadd.f32 %v1081, %v1289
        %v1291 = vpop.f32.mrb[0].mxu0
        %1292 = vmatprep.mubr.f32.mxu0 0.0
        %1293 = vmatmul.mubr.f32.gmra.mrb[0].mxu0 %v1151
        %v1294 = vpop.f32.mrb[0].mxu0
        %v1295 = vadd.f32 %v1086, %v1294
        %v1296 = vpop.f32.mrb[0].mxu0
        %1297 = vmatprep.mubr.f32.mxu0 0.0
        %1298 = vmatmul.mubr.f32.gmra.mrb[0].mxu0 %v1154
        %v1299 = vpop.f32.mrb[0].mxu0
        %v1300 = vadd.f32 %v1091, %v1299
        %v1301 = vpop.f32.mrb[0].mxu0
        %1302 = vmatprep.mubr.f32.mxu0 0.0
        %1303 = vmatmul.mubr.f32.gmra.mrb[0].mxu0 %v1157
        %v1304 = vpop.f32.mrb[0].mxu0
        %v1305 = vadd.f32 %v1096, %v1304
        %v1306 = vpop.f32.mrb[0].mxu0
        %1307 = vmatprep.mubr.f32.mxu0 0.0
        %1308 = vmatmul.mubr.f32.gmra.mrb[0].mxu0 %v1160
        %v1309 = vpop.f32.mrb[0].mxu0
        %v1310 = vadd.f32 %v1101, %v1309
        %v1311 = vpop.f32.mrb[0].mxu0
        %1312 = vmatprep.mubr.f32.mxu0 0.0
        %1313 = vmatmul.mubr.f32.gmra.mrb[0].mxu0 %v1163
        %v1314 = vpop.f32.mrb[0].mxu0
        %v1315 = vadd.f32 %v1106, %v1314
        %v1316 = vpop.f32.mrb[0].mxu0
        %1317 = vmatprep.mubr.f32.mxu0 0.0
        %1318 = vmatmul.mubr.f32.gmra.mrb[0].mxu0 %v1166
        %v1319 = vpop.f32.mrb[0].mxu0
        %v1320 = vadd.f32 %v1111, %v1319
        %v1321 = vpop.f32.mrb[0].mxu0
        %1322 = vdwg.mxu0
        %v1323 = vld [vmem:[%s857] sm:$0xff]
        %v1324 = vld [vmem:[%s857 + $0x8] sm:$0xff]
        %v1325 = vld [vmem:[%s857 + $0x18] sm:$0xff]
        %v1326 = vld [vmem:[%s857 + $0x20] sm:$0xff]
        %v1327 = vld [vmem:[%s857 + $0x30] sm:$0xff]
        %v1328 = vld [vmem:[%s857 + $0x38] sm:$0xff]
        %v1329 = vld [vmem:[%s857 + $0x48] sm:$0xff]
        %v1330 = vld [vmem:[%s857 + $0x50] sm:$0xff]
        %v1331 = vld [vmem:[%s857 + $0x60] sm:$0xff]
        %v1332 = vld [vmem:[%s857 + $0x68] sm:$0xff]
        %v1333 = vld [vmem:[%s857 + $0x78] sm:$0xff]
        %v1334 = vld [vmem:[%s857 + $0x80] sm:$0xff]
        %v1335 = vld [vmem:[%s857 + $0x90] sm:$0xff]
        %v1336 = vld [vmem:[%s857 + $0x98] sm:$0xff]
        %v1337 = vld [vmem:[%s857 + $0xa8] sm:$0xff]
        %v1338 = vld [vmem:[%s857 + $0xb0] sm:$0xff]
        %v1339 = vld [vmem:[%s857 + $0xc0] sm:$0xff]
        %v1340 = vld [vmem:[%s857 + $0xc8] sm:$0xff]
        %s1341 = scalar_lea.vmem %s2, 16
        %v1342 = vld [vmem:[%s1341] sm:$0xff]
        %v1344 = vsel %vm825, %v1323, 0
        %v1347 = vsel %vm825, %v1324, 0
        %v1350 = vsel %vm825, %v1325, 0
        %v1353 = vsel %vm825, %v1326, 0
        %v1356 = vsel %vm825, %v1327, 0
        %v1359 = vsel %vm825, %v1328, 0
        %v1362 = vsel %vm825, %v1329, 0
        %v1365 = vsel %vm825, %v1330, 0
        %v1368 = vsel %vm825, %v1331, 0
        %v1371 = vsel %vm825, %v1332, 0
        %v1374 = vsel %vm825, %v1333, 0
        %v1377 = vsel %vm825, %v1334, 0
        %v1380 = vsel %vm825, %v1335, 0
        %v1383 = vsel %vm825, %v1336, 0
        %v1386 = vsel %vm825, %v1337, 0
        %v1389 = vsel %vm825, %v1338, 0
        %v1392 = vsel %vm825, %v1339, 0
        %v1395 = vsel %vm825, %v1340, 0
        %1397 = vmatprep.subr.mxu0 0.0
        %1398 = vmatpush1.msra.mxu0 %v1342
        %1399 = vmatprep.subr.mxu0 0.0
        %1400 = vmatpush1.msra.mxu0 0.0
        %1401 = vmatprep.subr.mxu0 0.0
        %1402 = vmatpush1.msra.mxu0 0.0
        %1403 = vmatprep.subr.mxu0 0.0
        %1404 = vmatpush1.msra.mxu0 0.0
        %1405 = vmatprep.subr.mxu0 0.0
        %1406 = vmatpush1.msra.mxu0 0.0
        %1407 = vmatprep.subr.mxu0 0.0
        %1408 = vmatpush1.msra.mxu0 0.0
        %1409 = vmatprep.subr.mxu0 0.0
        %1410 = vmatpush1.msra.mxu0 0.0
        %1411 = vmatprep.subr.mxu0 0.0
        %1412 = vmatpush1.msra.mxu0 0.0
        %1413 = vmatprep.subr.mxu0 0.0
        %1414 = vmatpush1.msra.mxu0 0.0
        %1415 = vmatprep.subr.mxu0 0.0
        %1416 = vmatpush1.msra.mxu0 0.0
        %1417 = vmatprep.subr.mxu0 0.0
        %1418 = vmatpush1.msra.mxu0 0.0
        %1419 = vmatprep.subr.mxu0 0.0
        %1420 = vmatpush1.msra.mxu0 0.0
        %1421 = vmatprep.subr.mxu0 0.0
        %1422 = vmatpush1.msra.mxu0 0.0
        %1423 = vmatprep.subr.mxu0 0.0
        %1424 = vmatpush1.msra.mxu0 0.0
        %1425 = vmatprep.subr.mxu0 0.0
        %1426 = vmatpush1.msra.mxu0 0.0
        %1427 = vmatprep.subr.mxu0 0.0
        %1428 = vmatpush1.msra.mxu0 0.0
        %1429 = vmatprep.subr.mxu0 0.0
        %1430 = vmatpush1.msra.mxu0 0.0
        %1431 = vmatprep.subr.mxu0 0.0
        %1432 = vmatpush1.msra.mxu0 0.0
        %1433 = vmatprep.subr.mxu0 0.0
        %1434 = vmatpush1.msra.mxu0 0.0
        %1435 = vmatprep.subr.mxu0 0.0
        %1436 = vmatpush1.msra.mxu0 0.0
        %1437 = vmatprep.subr.mxu0 0.0
        %1438 = vmatpush1.msra.mxu0 0.0
        %1439 = vmatprep.subr.mxu0 0.0
        %1440 = vmatpush1.msra.mxu0 0.0
        %1441 = vmatprep.subr.mxu0 0.0
        %1442 = vmatpush1.msra.mxu0 0.0
        %1443 = vmatprep.subr.mxu0 0.0
        %1444 = vmatpush1.msra.mxu0 0.0
        %1445 = vmatprep.subr.mxu0 0.0
        %1446 = vmatpush1.msra.mxu0 0.0
        %1447 = vmatprep.subr.mxu0 0.0
        %1448 = vmatpush1.msra.mxu0 0.0
        %1449 = vmatprep.subr.mxu0 0.0
        %1450 = vmatpush1.msra.mxu0 0.0
        %1451 = vmatprep.subr.mxu0 0.0
        %1452 = vmatpush1.msra.mxu0 0.0
        %1453 = vmatprep.subr.mxu0 0.0
        %1454 = vmatpush1.msra.mxu0 0.0
        %1455 = vmatprep.subr.mxu0 0.0
        %1456 = vmatpush1.msra.mxu0 0.0
        %1457 = vmatprep.subr.mxu0 0.0
        %1458 = vmatpush1.msra.mxu0 0.0
        %1459 = vmatprep.subr.mxu0 0.0
        %1460 = vmatpush1.msra.mxu0 0.0
        %1461 = vmatprep.mubr.f32.mxu0 0.0
        %1462 = vmatmul.mubr.f32.gmra.mrb[0].mxu0 %v1344
        %v1463 = vpop.f32.mrb[0].mxu0
        %v1464 = vadd.f32 0.0, %v1463
        %v1465 = vpop.f32.mrb[0].mxu0
        %1466 = vmatprep.mubr.f32.mxu0 0.0
        %1467 = vmatmul.mubr.f32.gmra.mrb[0].mxu0 %v1347
        %v1468 = vpop.f32.mrb[0].mxu0
        %v1469 = vadd.f32 0.0, %v1468
        %v1470 = vpop.f32.mrb[0].mxu0
        %1471 = vmatprep.mubr.f32.mxu0 0.0
        %1472 = vmatmul.mubr.f32.gmra.mrb[0].mxu0 %v1350
        %v1473 = vpop.f32.mrb[0].mxu0
        %v1474 = vadd.f32 0.0, %v1473
        %v1475 = vpop.f32.mrb[0].mxu0
        %1476 = vmatprep.mubr.f32.mxu0 0.0
        %1477 = vmatmul.mubr.f32.gmra.mrb[0].mxu0 %v1353
        %v1478 = vpop.f32.mrb[0].mxu0
        %v1479 = vadd.f32 0.0, %v1478
        %v1480 = vpop.f32.mrb[0].mxu0
        %1481 = vmatprep.mubr.f32.mxu0 0.0
        %1482 = vmatmul.mubr.f32.gmra.mrb[0].mxu0 %v1356
        %v1483 = vpop.f32.mrb[0].mxu0
        %v1484 = vadd.f32 0.0, %v1483
        %v1485 = vpop.f32.mrb[0].mxu0
        %1486 = vmatprep.mubr.f32.mxu0 0.0
        %1487 = vmatmul.mubr.f32.gmra.mrb[0].mxu0 %v1359
        %v1488 = vpop.f32.mrb[0].mxu0
        %v1489 = vadd.f32 0.0, %v1488
        %v1490 = vpop.f32.mrb[0].mxu0
        %1491 = vmatprep.mubr.f32.mxu0 0.0
        %1492 = vmatmul.mubr.f32.gmra.mrb[0].mxu0 %v1362
        %v1493 = vpop.f32.mrb[0].mxu0
        %v1494 = vadd.f32 0.0, %v1493
        %v1495 = vpop.f32.mrb[0].mxu0
        %1496 = vmatprep.mubr.f32.mxu0 0.0
        %1497 = vmatmul.mubr.f32.gmra.mrb[0].mxu0 %v1365
        %v1498 = vpop.f32.mrb[0].mxu0
        %v1499 = vadd.f32 0.0, %v1498
        %v1500 = vpop.f32.mrb[0].mxu0
        %1501 = vmatprep.mubr.f32.mxu0 0.0
        %1502 = vmatmul.mubr.f32.gmra.mrb[0].mxu0 %v1368
        %v1503 = vpop.f32.mrb[0].mxu0
        %v1504 = vadd.f32 0.0, %v1503
        %v1505 = vpop.f32.mrb[0].mxu0
        %1506 = vmatprep.mubr.f32.mxu0 0.0
        %1507 = vmatmul.mubr.f32.gmra.mrb[0].mxu0 %v1371
        %v1508 = vpop.f32.mrb[0].mxu0
        %v1509 = vadd.f32 0.0, %v1508
        %v1510 = vpop.f32.mrb[0].mxu0
        %1511 = vmatprep.mubr.f32.mxu0 0.0
        %1512 = vmatmul.mubr.f32.gmra.mrb[0].mxu0 %v1374
        %v1513 = vpop.f32.mrb[0].mxu0
        %v1514 = vadd.f32 0.0, %v1513
        %v1515 = vpop.f32.mrb[0].mxu0
        %1516 = vmatprep.mubr.f32.mxu0 0.0
        %1517 = vmatmul.mubr.f32.gmra.mrb[0].mxu0 %v1377
        %v1518 = vpop.f32.mrb[0].mxu0
        %v1519 = vadd.f32 0.0, %v1518
        %v1520 = vpop.f32.mrb[0].mxu0
        %1521 = vmatprep.mubr.f32.mxu0 0.0
        %1522 = vmatmul.mubr.f32.gmra.mrb[0].mxu0 %v1380
        %v1523 = vpop.f32.mrb[0].mxu0
        %v1524 = vadd.f32 0.0, %v1523
        %v1525 = vpop.f32.mrb[0].mxu0
        %1526 = vmatprep.mubr.f32.mxu0 0.0
        %1527 = vmatmul.mubr.f32.gmra.mrb[0].mxu0 %v1383
        %v1528 = vpop.f32.mrb[0].mxu0
        %v1529 = vadd.f32 0.0, %v1528
        %v1530 = vpop.f32.mrb[0].mxu0
        %1531 = vmatprep.mubr.f32.mxu0 0.0
        %1532 = vmatmul.mubr.f32.gmra.mrb[0].mxu0 %v1386
        %v1533 = vpop.f32.mrb[0].mxu0
        %v1534 = vadd.f32 0.0, %v1533
        %v1535 = vpop.f32.mrb[0].mxu0
        %1536 = vmatprep.mubr.f32.mxu0 0.0
        %1537 = vmatmul.mubr.f32.gmra.mrb[0].mxu0 %v1389
        %v1538 = vpop.f32.mrb[0].mxu0
        %v1539 = vadd.f32 0.0, %v1538
        %v1540 = vpop.f32.mrb[0].mxu0
        %1541 = vmatprep.mubr.f32.mxu0 0.0
        %1542 = vmatmul.mubr.f32.gmra.mrb[0].mxu0 %v1392
        %v1543 = vpop.f32.mrb[0].mxu0
        %v1544 = vadd.f32 0.0, %v1543
        %v1545 = vpop.f32.mrb[0].mxu0
        %1546 = vmatprep.mubr.f32.mxu0 0.0
        %1547 = vmatmul.mubr.f32.gmra.mrb[0].mxu0 %v1395
        %v1548 = vpop.f32.mrb[0].mxu0
        %v1549 = vadd.f32 0.0, %v1548
        %v1550 = vpop.f32.mrb[0].mxu0
        %1551 = vdwg.mxu0
        %v1552 = vadd.f32 %v1235, %v1464
        %v1553 = vadd.f32 %v1240, %v1469
        %v1554 = vadd.f32 %v1245, %v1474
        %v1555 = vadd.f32 %v1250, %v1479
        %v1556 = vadd.f32 %v1255, %v1484
        %v1557 = vadd.f32 %v1260, %v1489
        %v1558 = vadd.f32 %v1265, %v1494
        %v1559 = vadd.f32 %v1270, %v1499
        %v1560 = vadd.f32 %v1275, %v1504
        %v1561 = vadd.f32 %v1280, %v1509
        %v1562 = vadd.f32 %v1285, %v1514
        %v1563 = vadd.f32 %v1290, %v1519
        %v1564 = vadd.f32 %v1295, %v1524
        %v1565 = vadd.f32 %v1300, %v1529
        %v1566 = vadd.f32 %v1305, %v1534
        %v1567 = vadd.f32 %v1310, %v1539
        %v1568 = vadd.f32 %v1315, %v1544
        %v1569 = vadd.f32 %v1320, %v1549
        %v1570 = vld [vmem:[%s857 + $0x1] sm:$0xff]
        %v1571 = vld [vmem:[%s857 + $0x9] sm:$0xff]
        %v1572 = vld [vmem:[%s857 + $0x19] sm:$0xff]
        %v1573 = vld [vmem:[%s857 + $0x21] sm:$0xff]
        %v1574 = vld [vmem:[%s857 + $0x31] sm:$0xff]
        %v1575 = vld [vmem:[%s857 + $0x39] sm:$0xff]
        %v1576 = vld [vmem:[%s857 + $0x49] sm:$0xff]
        %v1577 = vld [vmem:[%s857 + $0x51] sm:$0xff]
        %v1578 = vld [vmem:[%s857 + $0x61] sm:$0xff]
        %v1579 = vld [vmem:[%s857 + $0x69] sm:$0xff]
        %v1580 = vld [vmem:[%s857 + $0x79] sm:$0xff]
        %v1581 = vld [vmem:[%s857 + $0x81] sm:$0xff]
        %v1582 = vld [vmem:[%s857 + $0x91] sm:$0xff]
        %v1583 = vld [vmem:[%s857 + $0x99] sm:$0xff]
        %v1584 = vld [vmem:[%s857 + $0xa9] sm:$0xff]
        %v1585 = vld [vmem:[%s857 + $0xb1] sm:$0xff]
        %v1586 = vld [vmem:[%s857 + $0xc1] sm:$0xff]
        %v1587 = vld [vmem:[%s857 + $0xc9] sm:$0xff]
        %s1588 = scalar_lea.vmem %s2, 24
        %v1589 = vld [vmem:[%s1588] sm:$0xff]
        %v1591 = vsel %vm825, %v1570, 0
        %v1594 = vsel %vm825, %v1571, 0
        %v1597 = vsel %vm825, %v1572, 0
        %v1600 = vsel %vm825, %v1573, 0
        %v1603 = vsel %vm825, %v1574, 0
        %v1606 = vsel %vm825, %v1575, 0
        %v1609 = vsel %vm825, %v1576, 0
        %v1612 = vsel %vm825, %v1577, 0
        %v1615 = vsel %vm825, %v1578, 0
        %v1618 = vsel %vm825, %v1579, 0
        %v1621 = vsel %vm825, %v1580, 0
        %v1624 = vsel %vm825, %v1581, 0
        %v1627 = vsel %vm825, %v1582, 0
        %v1630 = vsel %vm825, %v1583, 0
        %v1633 = vsel %vm825, %v1584, 0
        %v1636 = vsel %vm825, %v1585, 0
        %v1639 = vsel %vm825, %v1586, 0
        %v1642 = vsel %vm825, %v1587, 0
        %1644 = vmatprep.subr.mxu0 0.0
        %1645 = vmatpush1.msra.mxu0 %v1589
        %1646 = vmatprep.subr.mxu0 0.0
        %1647 = vmatpush1.msra.mxu0 0.0
        %1648 = vmatprep.subr.mxu0 0.0
        %1649 = vmatpush1.msra.mxu0 0.0
        %1650 = vmatprep.subr.mxu0 0.0
        %1651 = vmatpush1.msra.mxu0 0.0
        %1652 = vmatprep.subr.mxu0 0.0
        %1653 = vmatpush1.msra.mxu0 0.0
        %1654 = vmatprep.subr.mxu0 0.0
        %1655 = vmatpush1.msra.mxu0 0.0
        %1656 = vmatprep.subr.mxu0 0.0
        %1657 = vmatpush1.msra.mxu0 0.0
        %1658 = vmatprep.subr.mxu0 0.0
        %1659 = vmatpush1.msra.mxu0 0.0
        %1660 = vmatprep.subr.mxu0 0.0
        %1661 = vmatpush1.msra.mxu0 0.0
        %1662 = vmatprep.subr.mxu0 0.0
        %1663 = vmatpush1.msra.mxu0 0.0
        %1664 = vmatprep.subr.mxu0 0.0
        %1665 = vmatpush1.msra.mxu0 0.0
        %1666 = vmatprep.subr.mxu0 0.0
        %1667 = vmatpush1.msra.mxu0 0.0
        %1668 = vmatprep.subr.mxu0 0.0
        %1669 = vmatpush1.msra.mxu0 0.0
        %1670 = vmatprep.subr.mxu0 0.0
        %1671 = vmatpush1.msra.mxu0 0.0
        %1672 = vmatprep.subr.mxu0 0.0
        %1673 = vmatpush1.msra.mxu0 0.0
        %1674 = vmatprep.subr.mxu0 0.0
        %1675 = vmatpush1.msra.mxu0 0.0
        %1676 = vmatprep.subr.mxu0 0.0
        %1677 = vmatpush1.msra.mxu0 0.0
        %1678 = vmatprep.subr.mxu0 0.0
        %1679 = vmatpush1.msra.mxu0 0.0
        %1680 = vmatprep.subr.mxu0 0.0
        %1681 = vmatpush1.msra.mxu0 0.0
        %1682 = vmatprep.subr.mxu0 0.0
        %1683 = vmatpush1.msra.mxu0 0.0
        %1684 = vmatprep.subr.mxu0 0.0
        %1685 = vmatpush1.msra.mxu0 0.0
        %1686 = vmatprep.subr.mxu0 0.0
        %1687 = vmatpush1.msra.mxu0 0.0
        %1688 = vmatprep.subr.mxu0 0.0
        %1689 = vmatpush1.msra.mxu0 0.0
        %1690 = vmatprep.subr.mxu0 0.0
        %1691 = vmatpush1.msra.mxu0 0.0
        %1692 = vmatprep.subr.mxu0 0.0
        %1693 = vmatpush1.msra.mxu0 0.0
        %1694 = vmatprep.subr.mxu0 0.0
        %1695 = vmatpush1.msra.mxu0 0.0
        %1696 = vmatprep.subr.mxu0 0.0
        %1697 = vmatpush1.msra.mxu0 0.0
        %1698 = vmatprep.subr.mxu0 0.0
        %1699 = vmatpush1.msra.mxu0 0.0
        %1700 = vmatprep.subr.mxu0 0.0
        %1701 = vmatpush1.msra.mxu0 0.0
        %1702 = vmatprep.subr.mxu0 0.0
        %1703 = vmatpush1.msra.mxu0 0.0
        %1704 = vmatprep.subr.mxu0 0.0
        %1705 = vmatpush1.msra.mxu0 0.0
        %1706 = vmatprep.subr.mxu0 0.0
        %1707 = vmatpush1.msra.mxu0 0.0
        %1708 = vmatprep.mubr.f32.mxu0 0.0
        %1709 = vmatmul.mubr.f32.gmra.mrb[0].mxu0 %v1591
        %v1710 = vpop.f32.mrb[0].mxu0
        %v1711 = vadd.f32 0.0, %v1710
        %v1712 = vpop.f32.mrb[0].mxu0
        %1713 = vmatprep.mubr.f32.mxu0 0.0
        %1714 = vmatmul.mubr.f32.gmra.mrb[0].mxu0 %v1594
        %v1715 = vpop.f32.mrb[0].mxu0
        %v1716 = vadd.f32 0.0, %v1715
        %v1717 = vpop.f32.mrb[0].mxu0
        %1718 = vmatprep.mubr.f32.mxu0 0.0
        %1719 = vmatmul.mubr.f32.gmra.mrb[0].mxu0 %v1597
        %v1720 = vpop.f32.mrb[0].mxu0
        %v1721 = vadd.f32 0.0, %v1720
        %v1722 = vpop.f32.mrb[0].mxu0
        %1723 = vmatprep.mubr.f32.mxu0 0.0
        %1724 = vmatmul.mubr.f32.gmra.mrb[0].mxu0 %v1600
        %v1725 = vpop.f32.mrb[0].mxu0
        %v1726 = vadd.f32 0.0, %v1725
        %v1727 = vpop.f32.mrb[0].mxu0
        %1728 = vmatprep.mubr.f32.mxu0 0.0
        %1729 = vmatmul.mubr.f32.gmra.mrb[0].mxu0 %v1603
        %v1730 = vpop.f32.mrb[0].mxu0
        %v1731 = vadd.f32 0.0, %v1730
        %v1732 = vpop.f32.mrb[0].mxu0
        %1733 = vmatprep.mubr.f32.mxu0 0.0
        %1734 = vmatmul.mubr.f32.gmra.mrb[0].mxu0 %v1606
        %v1735 = vpop.f32.mrb[0].mxu0
        %v1736 = vadd.f32 0.0, %v1735
        %v1737 = vpop.f32.mrb[0].mxu0
        %1738 = vmatprep.mubr.f32.mxu0 0.0
        %1739 = vmatmul.mubr.f32.gmra.mrb[0].mxu0 %v1609
        %v1740 = vpop.f32.mrb[0].mxu0
        %v1741 = vadd.f32 0.0, %v1740
        %v1742 = vpop.f32.mrb[0].mxu0
        %1743 = vmatprep.mubr.f32.mxu0 0.0
        %1744 = vmatmul.mubr.f32.gmra.mrb[0].mxu0 %v1612
        %v1745 = vpop.f32.mrb[0].mxu0
        %v1746 = vadd.f32 0.0, %v1745
        %v1747 = vpop.f32.mrb[0].mxu0
        %1748 = vmatprep.mubr.f32.mxu0 0.0
        %1749 = vmatmul.mubr.f32.gmra.mrb[0].mxu0 %v1615
        %v1750 = vpop.f32.mrb[0].mxu0
        %v1751 = vadd.f32 0.0, %v1750
        %v1752 = vpop.f32.mrb[0].mxu0
        %1753 = vmatprep.mubr.f32.mxu0 0.0
        %1754 = vmatmul.mubr.f32.gmra.mrb[0].mxu0 %v1618
        %v1755 = vpop.f32.mrb[0].mxu0
        %v1756 = vadd.f32 0.0, %v1755
        %v1757 = vpop.f32.mrb[0].mxu0
        %1758 = vmatprep.mubr.f32.mxu0 0.0
        %1759 = vmatmul.mubr.f32.gmra.mrb[0].mxu0 %v1621
        %v1760 = vpop.f32.mrb[0].mxu0
        %v1761 = vadd.f32 0.0, %v1760
        %v1762 = vpop.f32.mrb[0].mxu0
        %1763 = vmatprep.mubr.f32.mxu0 0.0
        %1764 = vmatmul.mubr.f32.gmra.mrb[0].mxu0 %v1624
        %v1765 = vpop.f32.mrb[0].mxu0
        %v1766 = vadd.f32 0.0, %v1765
        %v1767 = vpop.f32.mrb[0].mxu0
        %1768 = vmatprep.mubr.f32.mxu0 0.0
        %1769 = vmatmul.mubr.f32.gmra.mrb[0].mxu0 %v1627
        %v1770 = vpop.f32.mrb[0].mxu0
        %v1771 = vadd.f32 0.0, %v1770
        %v1772 = vpop.f32.mrb[0].mxu0
        %1773 = vmatprep.mubr.f32.mxu0 0.0
        %1774 = vmatmul.mubr.f32.gmra.mrb[0].mxu0 %v1630
        %v1775 = vpop.f32.mrb[0].mxu0
        %v1776 = vadd.f32 0.0, %v1775
        %v1777 = vpop.f32.mrb[0].mxu0
        %1778 = vmatprep.mubr.f32.mxu0 0.0
        %1779 = vmatmul.mubr.f32.gmra.mrb[0].mxu0 %v1633
        %v1780 = vpop.f32.mrb[0].mxu0
        %v1781 = vadd.f32 0.0, %v1780
        %v1782 = vpop.f32.mrb[0].mxu0
        %1783 = vmatprep.mubr.f32.mxu0 0.0
        %1784 = vmatmul.mubr.f32.gmra.mrb[0].mxu0 %v1636
        %v1785 = vpop.f32.mrb[0].mxu0
        %v1786 = vadd.f32 0.0, %v1785
        %v1787 = vpop.f32.mrb[0].mxu0
        %1788 = vmatprep.mubr.f32.mxu0 0.0
        %1789 = vmatmul.mubr.f32.gmra.mrb[0].mxu0 %v1639
        %v1790 = vpop.f32.mrb[0].mxu0
        %v1791 = vadd.f32 0.0, %v1790
        %v1792 = vpop.f32.mrb[0].mxu0
        %1793 = vmatprep.mubr.f32.mxu0 0.0
        %1794 = vmatmul.mubr.f32.gmra.mrb[0].mxu0 %v1642
        %v1795 = vpop.f32.mrb[0].mxu0
        %v1796 = vadd.f32 0.0, %v1795
        %v1797 = vpop.f32.mrb[0].mxu0
        %1798 = vdwg.mxu0
        %v1799 = vadd.f32 %v1552, %v1711
        %v1800 = vadd.f32 %v1553, %v1716
        %v1801 = vadd.f32 %v1554, %v1721
        %v1802 = vadd.f32 %v1555, %v1726
        %v1803 = vadd.f32 %v1556, %v1731
        %v1804 = vadd.f32 %v1557, %v1736
        %v1805 = vadd.f32 %v1558, %v1741
        %v1806 = vadd.f32 %v1559, %v1746
        %v1807 = vadd.f32 %v1560, %v1751
        %v1808 = vadd.f32 %v1561, %v1756
        %v1809 = vadd.f32 %v1562, %v1761
        %v1810 = vadd.f32 %v1563, %v1766
        %v1811 = vadd.f32 %v1564, %v1771
        %v1812 = vadd.f32 %v1565, %v1776
        %v1813 = vadd.f32 %v1566, %v1781
        %v1814 = vadd.f32 %v1567, %v1786
        %v1815 = vadd.f32 %v1568, %v1791
        %v1816 = vadd.f32 %v1569, %v1796
        %v1817 = vsel %vm825, %v1799, 0.0
        %v1818 = vsel %vm825, %v1801, 0.0
        %v1819 = vadd.f32 %v1817, %v1818
        %v1820 = vsel %vm825, %v1803, 0.0
        %v1821 = vadd.f32 %v1819, %v1820
        %v1822 = vsel %vm825, %v1805, 0.0
        %v1823 = vadd.f32 %v1821, %v1822
        %v1824 = vsel %vm825, %v1807, 0.0
        %v1825 = vadd.f32 %v1823, %v1824
        %v1826 = vsel %vm825, %v1809, 0.0
        %v1827 = vadd.f32 %v1825, %v1826
        %v1828 = vsel %vm825, %v1811, 0.0
        %v1829 = vadd.f32 %v1827, %v1828
        %v1830 = vsel %vm825, %v1813, 0.0
        %v1831 = vadd.f32 %v1829, %v1830
        %v1832 = vsel %vm825, %v1831, 0.0
        %v1833 = vrot.slane %v1832, 4
        %v1834 = vadd.f32 %v1832, %v1833
        %v1835 = vrot.slane %v1834, 2
        %v1836 = vadd.f32 %v1834, %v1835
        %v1837 = vrot.slane %v1836, 1
        %v1838 = vadd.f32 %v1836, %v1837
        %v1839 = vadd.f32 %v1838, 0.0
        %v1840 = vmul.f32 %v1799, %v1799
        %v1841 = vmul.f32 %v1801, %v1801
        %v1842 = vmul.f32 %v1803, %v1803
        %v1843 = vmul.f32 %v1805, %v1805
        %v1844 = vmul.f32 %v1807, %v1807
        %v1845 = vmul.f32 %v1809, %v1809
        %v1846 = vmul.f32 %v1811, %v1811
        %v1847 = vmul.f32 %v1813, %v1813
        %v1848 = vsel %vm825, %v1840, 0.0
        %v1849 = vsel %vm825, %v1841, 0.0
        %v1850 = vadd.f32 %v1848, %v1849
        %v1851 = vsel %vm825, %v1842, 0.0
        %v1852 = vadd.f32 %v1850, %v1851
        %v1853 = vsel %vm825, %v1843, 0.0
        %v1854 = vadd.f32 %v1852, %v1853
        %v1855 = vsel %vm825, %v1844, 0.0
        %v1856 = vadd.f32 %v1854, %v1855
        %v1857 = vsel %vm825, %v1845, 0.0
        %v1858 = vadd.f32 %v1856, %v1857
        %v1859 = vsel %vm825, %v1846, 0.0
        %v1860 = vadd.f32 %v1858, %v1859
        %v1861 = vsel %vm825, %v1847, 0.0
        %v1862 = vadd.f32 %v1860, %v1861
        %v1863 = vsel %vm825, %v1862, 0.0
        %v1864 = vrot.slane %v1863, 4
        %v1865 = vadd.f32 %v1863, %v1864
        %v1866 = vrot.slane %v1865, 2
        %v1867 = vadd.f32 %v1865, %v1866
        %v1868 = vrot.slane %v1867, 1
        %v1869 = vadd.f32 %v1867, %v1868
        %v1870 = vadd.f32 %v1869, 0.0
        %vm1871 = vcmask 130113
        %v1872 = vsel %vm1871, %v1799, 0.0
        %v1873 = vsel %vm1871, %v1801, 0.0
        %v1874 = vadd.f32 %v1872, %v1873
        %v1875 = vsel %vm1871, %v1803, 0.0
        %v1876 = vadd.f32 %v1874, %v1875
        %v1877 = vsel %vm1871, %v1805, 0.0
        %v1878 = vadd.f32 %v1876, %v1877
        %v1879 = vsel %vm1871, %v1807, 0.0
        %v1880 = vadd.f32 %v1878, %v1879
        %v1881 = vsel %vm1871, %v1809, 0.0
        %v1882 = vadd.f32 %v1880, %v1881
        %v1883 = vsel %vm1871, %v1811, 0.0
        %v1884 = vadd.f32 %v1882, %v1883
        %v1885 = vsel %vm1871, %v1813, 0.0
        %v1886 = vadd.f32 %v1884, %v1885
        %vm1887 = vcmask 122944
        %v1888 = vsel %vm1887, %v1800, 0.0
        %v1889 = vsel %vm1887, %v1802, 0.0
        %v1890 = vadd.f32 %v1888, %v1889
        %v1891 = vsel %vm1887, %v1804, 0.0
        %v1892 = vadd.f32 %v1890, %v1891
        %v1893 = vsel %vm1887, %v1806, 0.0
        %v1894 = vadd.f32 %v1892, %v1893
        %v1895 = vsel %vm1887, %v1808, 0.0
        %v1896 = vadd.f32 %v1894, %v1895
        %v1897 = vsel %vm1887, %v1810, 0.0
        %v1898 = vadd.f32 %v1896, %v1897
        %v1899 = vsel %vm1887, %v1812, 0.0
        %v1900 = vadd.f32 %v1898, %v1899
        %v1901 = vsel %vm1887, %v1814, 0.0
        %v1902 = vadd.f32 %v1900, %v1901
        %v1905 = vrot.slane %v1886, 1
        %v1906 = vrot.slane %v1902, 1
        %v1907 = vsel %vm299, %v1905, %v1906
        %vm1909 = vcmask 130112
        %v1910 = vsel %vm1909, %v1907, 0.0
        %v1911 = vrot.slane %v1910, 4
        %v1912 = vadd.f32 %v1910, %v1911
        %v1913 = vrot.slane %v1912, 2
        %v1914 = vadd.f32 %v1912, %v1913
        %v1915 = vrot.slane %v1914, 1
        %v1916 = vadd.f32 %v1914, %v1915
        %1918 = vrot.lane.b32.xlu0 %v1916, 120
        %v1919 = vpop.permute.xlu0 %1918
        %v1921 = vadd.f32 %v1839, %v1919
        %v1922 = vmul.f32 %v1800, %v1800
        %v1923 = vmul.f32 %v1802, %v1802
        %v1924 = vmul.f32 %v1804, %v1804
        %v1925 = vmul.f32 %v1806, %v1806
        %v1926 = vmul.f32 %v1808, %v1808
        %v1927 = vmul.f32 %v1810, %v1810
        %v1928 = vmul.f32 %v1812, %v1812
        %v1929 = vmul.f32 %v1814, %v1814
        %v1930 = vsel %vm1871, %v1840, 0.0
        %v1931 = vsel %vm1871, %v1841, 0.0
        %v1932 = vadd.f32 %v1930, %v1931
        %v1933 = vsel %vm1871, %v1842, 0.0
        %v1934 = vadd.f32 %v1932, %v1933
        %v1935 = vsel %vm1871, %v1843, 0.0
        %v1936 = vadd.f32 %v1934, %v1935
        %v1937 = vsel %vm1871, %v1844, 0.0
        %v1938 = vadd.f32 %v1936, %v1937
        %v1939 = vsel %vm1871, %v1845, 0.0
        %v1940 = vadd.f32 %v1938, %v1939
        %v1941 = vsel %vm1871, %v1846, 0.0
        %v1942 = vadd.f32 %v1940, %v1941
        %v1943 = vsel %vm1871, %v1847, 0.0
        %v1944 = vadd.f32 %v1942, %v1943
        %v1945 = vsel %vm1887, %v1922, 0.0
        %v1946 = vsel %vm1887, %v1923, 0.0
        %v1947 = vadd.f32 %v1945, %v1946
        %v1948 = vsel %vm1887, %v1924, 0.0
        %v1949 = vadd.f32 %v1947, %v1948
        %v1950 = vsel %vm1887, %v1925, 0.0
        %v1951 = vadd.f32 %v1949, %v1950
        %v1952 = vsel %vm1887, %v1926, 0.0
        %v1953 = vadd.f32 %v1951, %v1952
        %v1954 = vsel %vm1887, %v1927, 0.0
        %v1955 = vadd.f32 %v1953, %v1954
        %v1956 = vsel %vm1887, %v1928, 0.0
        %v1957 = vadd.f32 %v1955, %v1956
        %v1958 = vsel %vm1887, %v1929, 0.0
        %v1959 = vadd.f32 %v1957, %v1958
        %v1962 = vrot.slane %v1944, 1
        %v1963 = vrot.slane %v1959, 1
        %v1964 = vsel %vm299, %v1962, %v1963
        %v1966 = vsel %vm1909, %v1964, 0.0
        %v1967 = vrot.slane %v1966, 4
        %v1968 = vadd.f32 %v1966, %v1967
        %v1969 = vrot.slane %v1968, 2
        %v1970 = vadd.f32 %v1968, %v1969
        %v1971 = vrot.slane %v1970, 1
        %v1972 = vadd.f32 %v1970, %v1971
        %1974 = vrot.lane.b32.xlu0 %v1972, 120
        %v1975 = vpop.permute.xlu0 %1974
        %v1977 = vadd.f32 %v1870, %v1975
        %v1994 = vrot.slane %v1799, 1
        %v1995 = vrot.slane %v1800, 1
        %v1996 = vsel %vm299, %v1994, %v1995
        %v1997 = vrot.slane %v1801, 1
        %v1998 = vrot.slane %v1802, 1
        %v1999 = vsel %vm299, %v1997, %v1998
        %v2000 = vrot.slane %v1803, 1
        %v2001 = vrot.slane %v1804, 1
        %v2002 = vsel %vm299, %v2000, %v2001
        %v2003 = vrot.slane %v1805, 1
        %v2004 = vrot.slane %v1806, 1
        %v2005 = vsel %vm299, %v2003, %v2004
        %v2006 = vrot.slane %v1807, 1
        %v2007 = vrot.slane %v1808, 1
        %v2008 = vsel %vm299, %v2006, %v2007
        %v2009 = vrot.slane %v1809, 1
        %v2010 = vrot.slane %v1810, 1
        %v2011 = vsel %vm299, %v2009, %v2010
        %v2012 = vrot.slane %v1811, 1
        %v2013 = vrot.slane %v1812, 1
        %v2014 = vsel %vm299, %v2012, %v2013
        %v2015 = vrot.slane %v1813, 1
        %v2016 = vrot.slane %v1814, 1
        %v2017 = vsel %vm299, %v2015, %v2016
        %v2026 = vsel %vm825, %v1799, %v1996
        %v2027 = vsel %vm825, %v1801, %v1999
        %v2028 = vsel %vm825, %v1803, %v2002
        %v2029 = vsel %vm825, %v1805, %v2005
        %v2030 = vsel %vm825, %v1807, %v2008
        %v2031 = vsel %vm825, %v1809, %v2011
        %v2032 = vsel %vm825, %v1811, %v2014
        %v2033 = vsel %vm825, %v1813, %v2017
        %vm2034 = vcmask 130048
        %2035 = vst.msk [vmem:[%s194] sm:$0xff] %vm2034, %v2026
        %2036 = vst.msk [vmem:[%s194 + $0x10] sm:$0xff] %vm2034, %v2027
        %2037 = vst.msk [vmem:[%s194 + $0x20] sm:$0xff] %vm2034, %v2028
        %2038 = vst.msk [vmem:[%s194 + $0x30] sm:$0xff] %vm2034, %v2029
        %2039 = vst.msk [vmem:[%s194 + $0x40] sm:$0xff] %vm2034, %v2030
        %2040 = vst.msk [vmem:[%s194 + $0x50] sm:$0xff] %vm2034, %v2031
        %2041 = vst.msk [vmem:[%s194 + $0x60] sm:$0xff] %vm2034, %v2032
        %2042 = vst.msk [vmem:[%s194 + $0x70] sm:$0xff] %vm2034, %v2033
        %vm2043 = vcmask 195712
        %v2044 = vsel %vm2043, %v1801, 0.0
        %v2045 = vsel %vm2043, %v1803, 0.0
        %v2046 = vadd.f32 %v2044, %v2045
        %v2047 = vsel %vm2043, %v1805, 0.0
        %v2048 = vadd.f32 %v2046, %v2047
        %v2049 = vsel %vm2043, %v1807, 0.0
        %v2050 = vadd.f32 %v2048, %v2049
        %v2051 = vsel %vm2043, %v1809, 0.0
        %v2052 = vadd.f32 %v2050, %v2051
        %v2053 = vsel %vm2043, %v1811, 0.0
        %v2054 = vadd.f32 %v2052, %v2053
        %v2055 = vsel %vm2043, %v1813, 0.0
        %v2056 = vadd.f32 %v2054, %v2055
        %v2057 = vsel %vm2043, %v1815, 0.0
        %v2058 = vadd.f32 %v2056, %v2057
        %v2059 = vsel %vm2043, %v2058, 0.0
        %v2060 = vrot.slane %v2059, 4
        %v2061 = vadd.f32 %v2059, %v2060
        %v2062 = vrot.slane %v2061, 2
        %v2063 = vadd.f32 %v2061, %v2062
        %v2064 = vrot.slane %v2063, 1
        %v2065 = vadd.f32 %v2063, %v2064
        %2067 = vrot.lane.b32.xlu0 %v2065, 112
        %v2068 = vpop.permute.xlu0 %2067
        %v2070 = vadd.f32 %v1921, %v2068
        %v2071 = vmul.f32 %v1815, %v1815
        %v2072 = vsel %vm2043, %v1841, 0.0
        %v2073 = vsel %vm2043, %v1842, 0.0
        %v2074 = vadd.f32 %v2072, %v2073
        %v2075 = vsel %vm2043, %v1843, 0.0
        %v2076 = vadd.f32 %v2074, %v2075
        %v2077 = vsel %vm2043, %v1844, 0.0
        %v2078 = vadd.f32 %v2076, %v2077
        %v2079 = vsel %vm2043, %v1845, 0.0
        %v2080 = vadd.f32 %v2078, %v2079
        %v2081 = vsel %vm2043, %v1846, 0.0
        %v2082 = vadd.f32 %v2080, %v2081
        %v2083 = vsel %vm2043, %v1847, 0.0
        %v2084 = vadd.f32 %v2082, %v2083
        %v2085 = vsel %vm2043, %v2071, 0.0
        %v2086 = vadd.f32 %v2084, %v2085
        %v2087 = vsel %vm2043, %v2086, 0.0
        %v2088 = vrot.slane %v2087, 4
        %v2089 = vadd.f32 %v2087, %v2088
        %v2090 = vrot.slane %v2089, 2
        %v2091 = vadd.f32 %v2089, %v2090
        %v2092 = vrot.slane %v2091, 1
        %v2093 = vadd.f32 %v2091, %v2092
        %2095 = vrot.lane.b32.xlu0 %v2093, 112
        %v2096 = vpop.permute.xlu0 %2095
        %v2098 = vadd.f32 %v1977, %v2096
        %vm2099 = vcmask 261313
        %v2100 = vsel %vm2099, %v1801, 0.0
        %v2101 = vsel %vm2099, %v1803, 0.0
        %v2102 = vadd.f32 %v2100, %v2101
        %v2103 = vsel %vm2099, %v1805, 0.0
        %v2104 = vadd.f32 %v2102, %v2103
        %v2105 = vsel %vm2099, %v1807, 0.0
        %v2106 = vadd.f32 %v2104, %v2105
        %v2107 = vsel %vm2099, %v1809, 0.0
        %v2108 = vadd.f32 %v2106, %v2107
        %v2109 = vsel %vm2099, %v1811, 0.0
        %v2110 = vadd.f32 %v2108, %v2109
        %v2111 = vsel %vm2099, %v1813, 0.0
        %v2112 = vadd.f32 %v2110, %v2111
        %v2113 = vsel %vm2099, %v1815, 0.0
        %v2114 = vadd.f32 %v2112, %v2113
        %vm2115 = vcmask 254144
        %v2116 = vsel %vm2115, %v1802, 0.0
        %v2117 = vsel %vm2115, %v1804, 0.0
        %v2118 = vadd.f32 %v2116, %v2117
        %v2119 = vsel %vm2115, %v1806, 0.0
        %v2120 = vadd.f32 %v2118, %v2119
        %v2121 = vsel %vm2115, %v1808, 0.0
        %v2122 = vadd.f32 %v2120, %v2121
        %v2123 = vsel %vm2115, %v1810, 0.0
        %v2124 = vadd.f32 %v2122, %v2123
        %v2125 = vsel %vm2115, %v1812, 0.0
        %v2126 = vadd.f32 %v2124, %v2125
        %v2127 = vsel %vm2115, %v1814, 0.0
        %v2128 = vadd.f32 %v2126, %v2127
        %v2129 = vsel %vm2115, %v1816, 0.0
        %v2130 = vadd.f32 %v2128, %v2129
        %v2133 = vrot.slane %v2114, 1
        %v2134 = vrot.slane %v2130, 1
        %v2135 = vsel %vm299, %v2133, %v2134
        %vm2137 = vcmask 261312
        %v2138 = vsel %vm2137, %v2135, 0.0
        %v2139 = vrot.slane %v2138, 4
        %v2140 = vadd.f32 %v2138, %v2139
        %v2141 = vrot.slane %v2140, 2
        %v2142 = vadd.f32 %v2140, %v2141
        %v2143 = vrot.slane %v2142, 1
        %v2144 = vadd.f32 %v2142, %v2143
        %2146 = vrot.lane.b32.xlu0 %v2144, 104
        %v2147 = vpop.permute.xlu0 %2146
        %v2149 = vadd.f32 %v2070, %v2147
        %v2150 = vmul.f32 %v1816, %v1816
        %v2151 = vsel %vm2099, %v1841, 0.0
        %v2152 = vsel %vm2099, %v1842, 0.0
        %v2153 = vadd.f32 %v2151, %v2152
        %v2154 = vsel %vm2099, %v1843, 0.0
        %v2155 = vadd.f32 %v2153, %v2154
        %v2156 = vsel %vm2099, %v1844, 0.0
        %v2157 = vadd.f32 %v2155, %v2156
        %v2158 = vsel %vm2099, %v1845, 0.0
        %v2159 = vadd.f32 %v2157, %v2158
        %v2160 = vsel %vm2099, %v1846, 0.0
        %v2161 = vadd.f32 %v2159, %v2160
        %v2162 = vsel %vm2099, %v1847, 0.0
        %v2163 = vadd.f32 %v2161, %v2162
        %v2164 = vsel %vm2099, %v2071, 0.0
        %v2165 = vadd.f32 %v2163, %v2164
        %v2166 = vsel %vm2115, %v1923, 0.0
        %v2167 = vsel %vm2115, %v1924, 0.0
        %v2168 = vadd.f32 %v2166, %v2167
        %v2169 = vsel %vm2115, %v1925, 0.0
        %v2170 = vadd.f32 %v2168, %v2169
        %v2171 = vsel %vm2115, %v1926, 0.0
        %v2172 = vadd.f32 %v2170, %v2171
        %v2173 = vsel %vm2115, %v1927, 0.0
        %v2174 = vadd.f32 %v2172, %v2173
        %v2175 = vsel %vm2115, %v1928, 0.0
        %v2176 = vadd.f32 %v2174, %v2175
        %v2177 = vsel %vm2115, %v1929, 0.0
        %v2178 = vadd.f32 %v2176, %v2177
        %v2179 = vsel %vm2115, %v2150, 0.0
        %v2180 = vadd.f32 %v2178, %v2179
        %v2183 = vrot.slane %v2165, 1
        %v2184 = vrot.slane %v2180, 1
        %v2185 = vsel %vm299, %v2183, %v2184
        %v2187 = vsel %vm2137, %v2185, 0.0
        %v2188 = vrot.slane %v2187, 4
        %v2189 = vadd.f32 %v2187, %v2188
        %v2190 = vrot.slane %v2189, 2
        %v2191 = vadd.f32 %v2189, %v2190
        %v2192 = vrot.slane %v2191, 1
        %v2193 = vadd.f32 %v2191, %v2192
        %2195 = vrot.lane.b32.xlu0 %v2193, 104
        %v2196 = vpop.permute.xlu0 %2195
        %v2198 = vadd.f32 %v2098, %v2196
        %2200 = vrot.lane.b32.xlu0 %v1801, 112
        %v2201 = vpop.permute.xlu0 %2200
        %2202 = vrot.lane.b32.xlu0 %v1803, 112
        %v2203 = vpop.permute.xlu0 %2202
        %2204 = vrot.lane.b32.xlu0 %v1805, 112
        %v2205 = vpop.permute.xlu0 %2204
        %2206 = vrot.lane.b32.xlu0 %v1807, 112
        %v2207 = vpop.permute.xlu0 %2206
        %2208 = vrot.lane.b32.xlu0 %v1809, 112
        %v2209 = vpop.permute.xlu0 %2208
        %2210 = vrot.lane.b32.xlu0 %v1811, 112
        %v2211 = vpop.permute.xlu0 %2210
        %2212 = vrot.lane.b32.xlu0 %v1813, 112
        %v2213 = vpop.permute.xlu0 %2212
        %2214 = vrot.lane.b32.xlu0 %v1815, 112
        %v2215 = vpop.permute.xlu0 %2214
        %v2225 = vrot.slane %v1815, 1
        %v2226 = vrot.slane %v1816, 1
        %v2227 = vsel %vm299, %v2225, %v2226
        %2228 = vrot.lane.b32.xlu0 %v1999, 112
        %v2229 = vpop.permute.xlu0 %2228
        %2230 = vrot.lane.b32.xlu0 %v2002, 112
        %v2231 = vpop.permute.xlu0 %2230
        %2232 = vrot.lane.b32.xlu0 %v2005, 112
        %v2233 = vpop.permute.xlu0 %2232
        %2234 = vrot.lane.b32.xlu0 %v2008, 112
        %v2235 = vpop.permute.xlu0 %2234
        %2236 = vrot.lane.b32.xlu0 %v2011, 112
        %v2237 = vpop.permute.xlu0 %2236
        %2238 = vrot.lane.b32.xlu0 %v2014, 112
        %v2239 = vpop.permute.xlu0 %2238
        %2240 = vrot.lane.b32.xlu0 %v2017, 112
        %v2241 = vpop.permute.xlu0 %2240
        %2242 = vrot.lane.b32.xlu0 %v2227, 112
        %v2243 = vpop.permute.xlu0 %2242
        %v2252 = vsel %vm825, %v2201, %v2229
        %v2253 = vsel %vm825, %v2203, %v2231
        %v2254 = vsel %vm825, %v2205, %v2233
        %v2255 = vsel %vm825, %v2207, %v2235
        %v2256 = vsel %vm825, %v2209, %v2237
        %v2257 = vsel %vm825, %v2211, %v2239
        %v2258 = vsel %vm825, %v2213, %v2241
        %v2259 = vsel %vm825, %v2215, %v2243
        %s2260 = scalar_lea.vmem %s194, 8 [#allocation3]
        %2261 = vst.msk [vmem:[%s2260] sm:$0xff] %vm2034, %v2252
        %2262 = vst.msk [vmem:[%s2260 + $0x10] sm:$0xff] %vm2034, %v2253
        %2263 = vst.msk [vmem:[%s2260 + $0x20] sm:$0xff] %vm2034, %v2254
        %2264 = vst.msk [vmem:[%s2260 + $0x30] sm:$0xff] %vm2034, %v2255
        %2265 = vst.msk [vmem:[%s2260 + $0x40] sm:$0xff] %vm2034, %v2256
        %2266 = vst.msk [vmem:[%s2260 + $0x50] sm:$0xff] %vm2034, %v2257
        %2267 = vst.msk [vmem:[%s2260 + $0x60] sm:$0xff] %vm2034, %v2258
        %2268 = vst.msk [vmem:[%s2260 + $0x70] sm:$0xff] %vm2034, %v2259
        %2269 = vst.msk [vmem:[%s201] sm:$0x1] %vm828, %v2149
        %2270 = vst.msk [vmem:[%s201 + $0x1] sm:$0x1] %vm828, %v2198
        %s2271 = sand.u32 %s98, 1
        %s2272 = scalar_lea.sflag [#allocation4], %s2271
        %s2273 = sand.u32 %s98, 1
        %s2274 = smul.addr %s2273, 128
        %s2275 = scalar_lea.vmem [#allocation3], %s2274
        %s2276 = sand.u32 %s124, 1
        %s2277 = scalar_lea.sflag [#allocation6], %s2276
        %s2278 = sand.u32 %s124, 1
        %s2279 = smul.addr %s2278, 2
        %s2280 = scalar_lea.vmem [#allocation5], %s2279
        // Predicated region
        $region33: #{tpu_custom_call.1} parent=31 // pred_check
          %p2281 = pneg %p108
        $region34: #{tpu_custom_call.1} parent=31 // pred_check_branch
          %2283 = sbr.rel (%p2281) target = $region36
        $region35: #{tpu_custom_call.1} parent=31 // pred_region
          %s2285 = ssub.s32 2048, 2048
          %2286 = vsyncadd %s2272, %s2285
          %s2287 = smul.addr %s22, 16
          %s2288 = smul.addr %s2287, 128
          %s2289 = scalar_lea.hbm %s3, %s2288
          %s2290 = sshll.u32 %s2275, 4
          %s2291 = int_to_ptr.vmem [resolvable:$true] %s2290
          %2296 = dma.vmem_to_hbm [thread:$0]  %s2291, 2048, %s2289, %s2272, 128, 128, 8
        $region36: #{tpu_custom_call.1} parent=31 // pred_fallthru
          _
        // Predicated region
        $region37: #{tpu_custom_call.1} parent=31 // pred_check
          %p2297 = pneg %p134
        $region38: #{tpu_custom_call.1} parent=31 // pred_check_branch
          %2299 = sbr.rel (%p2297) target = $region40
        $region39: #{tpu_custom_call.1} parent=31 // pred_region
          %s2301 = ssub.s32 32, 32
          %2302 = vsyncadd %s2277, %s2301
          %s2303 = smul.addr %s22, 32
          %s2304 = scalar_lea.hbm %s4, %s2303
          %s2306 = sshll.u32 %s2280, 4
          %s2307 = int_to_ptr.vmem [resolvable:$true] %s2306
          %2309 = dma.vmem_to_hbm [thread:$0]  %s2307, 32, %s2304, %s2277
        $region40: #{tpu_custom_call.1} parent=31 // pred_fallthru
          _
      $region32: #{tpu_custom_call.1} parent=5 // pred_fallthru
        _
      %p2310 = scmp.le.s32.totalorder 2, %s17
      // Predicated region
      $region41: #{tpu_custom_call.1} parent=5 // pred_check
        %p2311 = pneg %p2310
      $region42: #{tpu_custom_call.1} parent=5 // pred_check_branch
        %2313 = sbr.rel (%p2311) target = $region44
      $region43: #{tpu_custom_call.1} parent=5 // pred_region
        %s2314 = ssub.s32 %s17, 2
        // Predicated region
        $region45: #{tpu_custom_call.1} parent=43 // pred_check
          %p2315 = pneg %p114
        $region46: #{tpu_custom_call.1} parent=43 // pred_check_branch
          %2317 = sbr.rel (%p2315) target = $region48
        $region47: #{tpu_custom_call.1} parent=43 // pred_region
          %s2318 = sand.u32 %s99, 1
          %s2319 = scalar_lea.sflag [#allocation4], %s2318
          %s2320 = sand.u32 %s99, 1
          %s2321 = smul.addr %s2320, 128
          %s2322 = scalar_lea.vmem [#allocation3], %s2321
          %2323 = dma.done %s2319, 2048
        $region48: #{tpu_custom_call.1} parent=43 // pred_fallthru
          _
        // Predicated region
        $region49: #{tpu_custom_call.1} parent=43 // pred_check
          %p2324 = pneg %p140
        $region50: #{tpu_custom_call.1} parent=43 // pred_check_branch
          %2326 = sbr.rel (%p2324) target = $region52
        $region51: #{tpu_custom_call.1} parent=43 // pred_region
          %s2327 = sand.u32 %s125, 1
          %s2328 = scalar_lea.sflag [#allocation6], %s2327
          %s2329 = sand.u32 %s125, 1
          %s2330 = smul.addr %s2329, 2
          %s2331 = scalar_lea.vmem [#allocation5], %s2330
          %2332 = dma.done %s2328, 32
        $region52: #{tpu_custom_call.1} parent=43 // pred_fallthru
          _
      $region44: #{tpu_custom_call.1} parent=5 // pred_fallthru
        _
    $region6: #{tpu_custom_call.1} parent=1 // loop_footer
      %s21 = sadd.s32 1, %s17
    $region7: #{tpu_custom_call.1} parent=1 // loop_footer_branch
      %16 = sbr.rel target = $region3
    $region8: #{tpu_custom_call.1} parent=1 // loop_exit
      _
    %2333 = vsyncpa [#allocation4], 1
    %s2334 = scalar_lea.sflag [#allocation4], 1
    %2335 = vsyncpa %s2334, 1
    %2336 = vsyncpa [#allocation6], 1
    %s2337 = scalar_lea.sflag [#allocation6], 1
    %2338 = vsyncpa %s2337, 1

</llo_original>
